<compile_context>
chip_gen: v7x
topology: tpu7x:2x2x1
jax: 0.10.0
libtpu: 0.0.40
codegen_flags: <defaults>
</compile_context>

<pallas_src>
import functools
import math

import jax
import jax.numpy as jnp
from jax import lax
from jax.experimental import pallas as pl
from jax.experimental.pallas import tpu as pltpu


# --------------------------------------------------------------------------
# Kernel
# --------------------------------------------------------------------------
def _encoder_layer_kernel(x_ref,                      # (B_TILE*Lp, E) activation slab
                          w_in_ref, b_in_ref,         # (E, 3E) bf16, (1, 3E) f32 (Q cols pre-scaled)
                          w_out_ref, b_out_ref,       # (E, E) bf16, (1, E) f32
                          g1_ref, be1_ref,            # layernorm1 (1, E), (1, E)
                          w1_ref, b1_ref,             # (E, F) bf16, (1, F) f32
                          w2_ref, b2_ref,             # (F, E) bf16, (1, E) f32
                          g2_ref, be2_ref,            # layernorm2 (1, E), (1, E)
                          o_ref,                      # (B_TILE*Lp, E)
                          cat_ref,                    # VMEM scratch (B_TILE*Lp, E) bf16
                          *, b_tile, seq_pad, seq_true, d_model, nhead):
    BT, Lp, Lt, E, H = b_tile, seq_pad, seq_true, d_model, nhead
    dh = E // H
    R = BT * Lp

    x = x_ref[...].astype(jnp.float32)                # (R, E) == src + pos + mod
    x_bf = x.astype(jnp.bfloat16)

    # ---- QKV projection: one slab-wide MXU matmul (bf16 in, f32 acc).
    #      1/sqrt(dh) is already folded into the Q columns of w_in/b_in.
    qkv = jnp.dot(x_bf, w_in_ref[...],
                  preferred_element_type=jnp.float32) + b_in_ref[...]
    # split back into (batch, seq); layout-trivial because Lp % 8 == 0
    q3 = qkv[:, :E].reshape(BT, Lp, E)
    k3 = qkv[:, E:2 * E].reshape(BT, Lp, E)
    v3 = qkv[:, 2 * E:].reshape(BT, Lp, E)

    # padded key positions masked via a (1, 1, Lp) additive bias (static branch)
    if Lp > Lt:
        key_pos = lax.broadcasted_iota(jnp.int32, (1, 1, Lp), dimension=2)
        pad_bias = jnp.where(key_pos < Lt, 0.0, -1e30).astype(jnp.float32)
    else:
        pad_bias = None

    # ---- attention: static head loop; each head's PV output lands in its column
    #      slice of cat_ref, the out-projection is a single full-K matmul after.
    # TODO(synk): for large H move heads onto a fori_loop / grid axis to bound live
    #             ranges, and batch heads into one einsum if Mosaic lowers the 4-D
    #             (BT, Lp, H, dh) -> (BT*H, Lp, dh) relayout cleanly.
    for h in range(H):
        sl = slice(h * dh, (h + 1) * dh)
        qh = q3[:, :, sl].astype(jnp.bfloat16)        # (BT, Lp, dh)
        kh = k3[:, :, sl].astype(jnp.bfloat16)
        vh = v3[:, :, sl].astype(jnp.bfloat16)

        s = jnp.einsum('bld,bmd->blm', qh, kh,
                       preferred_element_type=jnp.float32)            # (BT,Lp,Lp)
        if pad_bias is not None:
            s = s + pad_bias
        s = s - jnp.max(s, axis=-1, keepdims=True)
        p = jnp.exp(s)
        l = jnp.sum(p, axis=-1, keepdims=True)                         # (BT,Lp,1)
        oh = jnp.einsum('blm,bmd->bld', p.astype(jnp.bfloat16), vh,
                        preferred_element_type=jnp.float32)            # (BT,Lp,dh)
        oh = oh * pl.reciprocal(l, approx=True)        # normalize AFTER PV (O(Lp*dh))
        cat_ref[:, sl] = oh.reshape(R, dh).astype(jnp.bfloat16)

    attn = jnp.dot(cat_ref[...], w_out_ref[...],
                   preferred_element_type=jnp.float32) + b_out_ref[...]

    # ---- residual + layernorm (f32, rsqrt on the EUP) -----------------------
    def layer_norm(t, g_ref, b_ref):
        mu = jnp.mean(t, axis=-1, keepdims=True)
        tc = t - mu
        var = jnp.mean(tc * tc, axis=-1, keepdims=True)
        return tc * lax.rsqrt(var + 1e-5) * g_ref[...] + b_ref[...]

    x1 = layer_norm(x + attn, g1_ref, be1_ref)

    # ---- feed-forward (relu), slab matmuls ----------------------------------
    h1 = jnp.dot(x1.astype(jnp.bfloat16), w1_ref[...],
                 preferred_element_type=jnp.float32) + b1_ref[...]
    h1 = jnp.maximum(h1, 0.0)
    ff = jnp.dot(h1.astype(jnp.bfloat16), w2_ref[...],
                 preferred_element_type=jnp.float32) + b2_ref[...]

    out = layer_norm(x1 + ff, g2_ref, be2_ref)
    o_ref[...] = out.astype(o_ref.dtype)


# --------------------------------------------------------------------------
# Wrapper
# --------------------------------------------------------------------------
def _const_spec(shape):
    zeros = (0,) * len(shape)
    return pl.BlockSpec(shape, lambda i, _z=zeros: _z)


def _pick_batch_tile(N, Lp, E, F, vmem_budget, weight_bytes):
    """Per-batch-element VMEM estimate (bytes) -> largest batch tile that fits."""
    io = 2 * 2 * Lp * E * 4                  # double-buffered input + output slabs
    act = 4 * Lp * (8 * E + F)               # x, qkv, cat, attn, x1, h1, ff (f32-ish)
    attn = Lp * Lp * (4 + 4 + 2)             # scores f32 + exp f32 + probs bf16 (1 head)
    per_elem = io + act + attn
    avail = max(vmem_budget - weight_bytes, per_elem)
    bt = int(max(1, min(N, avail // per_elem)))
    if N >= 2:
        bt = min(bt, N // 2)                 # >= 2 grid steps: keeps both v7x TCs busy
    bt = max(bt, 1)
    while N % bt:
        bt -= 1
    return bt


def transformer_encoder_layer(src, params, *, nhead, src_pos=None, src_mod=None,
                              batch_tile=None):
    """src/src_pos/src_mod: (L, N, E)  (PyTorch MultiheadAttention layout)."""
    L, N, E = src.shape
    assert E % nhead == 0, "d_model must be divisible by nhead"
    dh = E // nhead

    # Reproduce the in-place `tensor += pos` semantics of with_pos_embed.
    x = src
    if src_pos is not None:
        x = x + src_pos
    if src_mod is not None:
        x = x + src_mod

    # Pad L to a multiple of 8 (sublane tile) so in-kernel (b, l) <-> row reshapes are
    # layout-trivial; padded key positions are masked inside the kernel.
    Lp = ((L + 7) // 8) * 8
    x_nle = jnp.transpose(x, (1, 0, 2))               # (N, L, E)
    if Lp != L:
        x_nle = jnp.pad(x_nle, ((0, 0), (0, Lp - L), (0, 0)))
    x_2d = x_nle.reshape(N * Lp, E)                   # (N*Lp, E) slab

    F = params["w1"].shape[1]

    # ---- weights: fold softmax scale into Q projection; matmul operands in bf16 ----
    scale = 1.0 / math.sqrt(dh)
    col_scale = jnp.concatenate([jnp.full((E,), scale, jnp.float32),
                                 jnp.ones((2 * E,), jnp.float32)])
    w_in = (params["w_in"].astype(jnp.float32) * col_scale[None, :]).astype(jnp.bfloat16)
    b_in = params["b_in"].astype(jnp.float32) * col_scale[None, :]
    w_out = params["w_out"].astype(jnp.bfloat16)
    w1 = params["w1"].astype(jnp.bfloat16)
    w2 = params["w2"].astype(jnp.bfloat16)

    weights = (w_in, b_in, w_out, params["b_out"],
               params["g1"], params["be1"], w1, params["b1"],
               w2, params["b2"], params["g2"], params["be2"])

    # ---- VMEM budget / batch tile -------------------------------------------------
    try:
        vmem_cap = int(pltpu.get_tpu_info().vmem_capacity_bytes)
    except Exception:
        vmem_cap = 64 << 20                           # conservative (v7x per-TC VMEM)
    vmem_limit = max(32 << 20, min(vmem_cap * 3 // 4, 96 << 20))

    weight_bytes = 2 * sum(int(w.size) * w.dtype.itemsize for w in weights)

    if batch_tile is None:
        batch_tile = _pick_batch_tile(N, Lp, E, F, vmem_limit, weight_bytes)
    BT = batch_tile
    assert N % BT == 0

    kernel = functools.partial(_encoder_layer_kernel, b_tile=BT, seq_pad=Lp,
                               seq_true=L, d_model=E, nhead=nhead)

    grid_spec = pltpu.PrefetchScalarGridSpec(
        num_scalar_prefetch=0,
        grid=(N // BT,),
        in_specs=[pl.BlockSpec((BT * Lp, E), lambda i: (i, 0))]
                 + [_const_spec(w.shape) for w in weights],
        out_specs=pl.BlockSpec((BT * Lp, E), lambda i: (i, 0)),
        scratch_shapes=[pltpu.VMEM((BT * Lp, E), jnp.bfloat16)])

    out_2d = pl.pallas_call(
        kernel,
        out_shape=jax.ShapeDtypeStruct((N * Lp, E), src.dtype),
        grid_spec=grid_spec,
        compiler_params=pltpu.CompilerParams(
            dimension_semantics=("parallel",),
            vmem_limit_bytes=int(vmem_limit)),
    )(x_2d, *weights)

    out = out_2d.reshape(N, Lp, E)[:, :L, :]
    return jnp.transpose(out, (1, 0, 2))              # back to (L, N, E)


# --------------------------------------------------------------------------
# Pure-JAX reference (forward_post, eval mode, no masks)
# --------------------------------------------------------------------------
def _reference(src, params, *, nhead, src_pos=None, src_mod=None,
               compute_dtype=jnp.float32):
    x = src
    if src_pos is not None:
        x = x + src_pos
    if src_mod is not None:
        x = x + src_mod
    L, N, E = x.shape
    dh = E // nhead
    scale = 1.0 / math.sqrt(dh)
    cd = compute_dtype

    def mm(a, w):
        return jnp.einsum("...e,ef->...f", a.astype(cd), w.astype(cd),
                          preferred_element_type=jnp.float32)

    qkv = mm(x, params["w_in"]) + params["b_in"][0]
    q, k, v = qkv[..., :E], qkv[..., E:2 * E], qkv[..., 2 * E:]

    def split(t):  # (L,N,E) -> (N,H,L,dh)
        return jnp.transpose(t.reshape(L, N, nhead, dh), (1, 2, 0, 3))

    qh, kh, vh = split(q), split(k), split(v)
    s = jnp.einsum("nhld,nhmd->nhlm", qh.astype(cd), kh.astype(cd),
                   preferred_element_type=jnp.float32) * scale
    p = jax.nn.softmax(s, axis=-1)
    o = jnp.einsum("nhlm,nhmd->nhld", p.astype(cd), vh.astype(cd),
                   preferred_element_type=jnp.float32)
    o = jnp.transpose(o, (2, 0, 1, 3)).reshape(L, N, E)
    attn = mm(o, params["w_out"]) + params["b_out"][0]

    def ln(t, g, b):
        mu = jnp.mean(t, -1, keepdims=True)
        var = jnp.mean((t - mu) ** 2, -1, keepdims=True)
        return (t - mu) / jnp.sqrt(var + 1e-5) * g[0] + b[0]

    x1 = ln(x + attn, params["g1"], params["be1"])
    h = jax.nn.relu(mm(x1, params["w1"]) + params["b1"][0])
    ff = mm(h, params["w2"]) + params["b2"][0]
    return ln(x1 + ff, params["g2"], params["be2"])


def init_params(key, d_model, nhead, dim_feedforward):
    keys = jax.random.split(key, 8)
    s = 0.05
    return {
        "w_in":  s * jax.random.normal(keys[0], (d_model, 3 * d_model), jnp.float32),
        "b_in":  s * jax.random.normal(keys[1], (1, 3 * d_model), jnp.float32),
        "w_out": s * jax.random.normal(keys[2], (d_model, d_model), jnp.float32),
        "b_out": s * jax.random.normal(keys[3], (1, d_model), jnp.float32),
        "g1":    jnp.ones((1, d_model), jnp.float32),
        "be1":   jnp.zeros((1, d_model), jnp.float32),
        "w1":    s * jax.random.normal(keys[4], (d_model, dim_feedforward), jnp.float32),
        "b1":    s * jax.random.normal(keys[5], (1, dim_feedforward), jnp.float32),
        "w2":    s * jax.random.normal(keys[6], (dim_feedforward, d_model), jnp.float32),
        "b2":    s * jax.random.normal(keys[7], (1, d_model), jnp.float32),
        "g2":    jnp.ones((1, d_model), jnp.float32),
        "be2":   jnp.zeros((1, d_model), jnp.float32),
    }


if __name__ == "__main__":
    L, N, d_model, nhead, dim_ff = 8, 2, 32, 4, 64

    key = jax.random.PRNGKey(0)
    k_src, k_pos, k_mod, k_par = jax.random.split(key, 4)

    src = jax.random.normal(k_src, (L, N, d_model), jnp.float32)
    pos = 0.1 * jax.random.normal(k_pos, (L, N, d_model), jnp.float32)
    mod = 0.1 * jax.random.normal(k_mod, (L, N, d_model), jnp.float32)
    params = init_params(k_par, d_model, nhead, dim_ff)

    out = transformer_encoder_layer(src, params, nhead=nhead, src_pos=pos, src_mod=mod)
    out = jax.block_until_ready(out)
    assert out.shape == (L, N, d_model)

    # bf16-matmul reference (mirrors the kernel's casts; remaining diffs are approx
    # reciprocal / rsqrt / accumulation order), plus a looser check against the
    # pure-f32 PyTorch-semantics reference.  Loosened tolerances are an intentional
    # eval-mode accuracy tradeoff.
    ref_bf16 = _reference(src, params, nhead=nhead, src_pos=pos, src_mod=mod,
                          compute_dtype=jnp.bfloat16)
    ref_f32 = _reference(src, params, nhead=nhead, src_pos=pos, src_mod=mod,
                         compute_dtype=jnp.float32)
    assert jnp.allclose(out, ref_bf16, atol=2e-2, rtol=2e-2), \
        float(jnp.max(jnp.abs(out - ref_bf16)))
    assert jnp.allclose(out, ref_f32, atol=5e-2, rtol=5e-2), \
        float(jnp.max(jnp.abs(out - ref_f32)))

    print("KERNEL_OK")
</pallas_src>

<mosaic_0001>
module attributes {stable_mosaic.version = 11 : i64} {
  func.func @_encoder_layer_kernel(%arg0: i32, %arg1: memref<8x32xf32, #tpu.memory_space<vmem>>, %arg2: memref<32x96xbf16, #tpu.memory_space<vmem>>, %arg3: memref<1x96xf32, #tpu.memory_space<vmem>>, %arg4: memref<32x32xbf16, #tpu.memory_space<vmem>>, %arg5: memref<1x32xf32, #tpu.memory_space<vmem>>, %arg6: memref<1x32xf32, #tpu.memory_space<vmem>>, %arg7: memref<1x32xf32, #tpu.memory_space<vmem>>, %arg8: memref<32x64xbf16, #tpu.memory_space<vmem>>, %arg9: memref<1x64xf32, #tpu.memory_space<vmem>>, %arg10: memref<64x32xbf16, #tpu.memory_space<vmem>>, %arg11: memref<1x32xf32, #tpu.memory_space<vmem>>, %arg12: memref<1x32xf32, #tpu.memory_space<vmem>>, %arg13: memref<1x32xf32, #tpu.memory_space<vmem>>, %arg14: memref<8x32xf32, #tpu.memory_space<vmem>>, %arg15: memref<8x32xbf16, #tpu.memory_space<vmem>>) attributes {dimension_semantics = [#tpu.dimension_semantics<parallel>], iteration_bounds = array<i64: 2>, scalar_prefetch = 0 : i64, scratch_operands = 1 : i64, tpu.core_type = #tpu.core_type<tc>, window_params = [{transform_indices = @transform_0, window_bounds = array<i64: 8, 32>}, {pipeline_mode = #tpu.pipeline_mode<synchronous>, transform_indices = @transform_1, window_bounds = array<i64: 32, 96>}, {pipeline_mode = #tpu.pipeline_mode<synchronous>, transform_indices = @transform_2, window_bounds = array<i64: 1, 96>}, {pipeline_mode = #tpu.pipeline_mode<synchronous>, transform_indices = @transform_3, window_bounds = array<i64: 32, 32>}, {pipeline_mode = #tpu.pipeline_mode<synchronous>, transform_indices = @transform_4, window_bounds = array<i64: 1, 32>}, {pipeline_mode = #tpu.pipeline_mode<synchronous>, transform_indices = @transform_5, window_bounds = array<i64: 1, 32>}, {pipeline_mode = #tpu.pipeline_mode<synchronous>, transform_indices = @transform_6, window_bounds = array<i64: 1, 32>}, {pipeline_mode = #tpu.pipeline_mode<synchronous>, transform_indices = @transform_7, window_bounds = array<i64: 32, 64>}, {pipeline_mode = #tpu.pipeline_mode<synchronous>, transform_indices = @transform_8, window_bounds = array<i64: 1, 64>}, {pipeline_mode = #tpu.pipeline_mode<synchronous>, transform_indices = @transform_9, window_bounds = array<i64: 64, 32>}, {pipeline_mode = #tpu.pipeline_mode<synchronous>, transform_indices = @transform_10, window_bounds = array<i64: 1, 32>}, {pipeline_mode = #tpu.pipeline_mode<synchronous>, transform_indices = @transform_11, window_bounds = array<i64: 1, 32>}, {pipeline_mode = #tpu.pipeline_mode<synchronous>, transform_indices = @transform_12, window_bounds = array<i64: 1, 32>}, {transform_indices = @transform_13, window_bounds = array<i64: 8, 32>}]} {
    %c0 = arith.constant 0 : index
    %c0_0 = arith.constant 0 : index
    %0 = vector.load %arg1[%c0, %c0_0] : memref<8x32xf32, #tpu.memory_space<vmem>>, vector<8x32xf32>
    %1 = arith.truncf %0 : vector<8x32xf32> to vector<8x32xbf16>
    %c0_1 = arith.constant 0 : index
    %c0_2 = arith.constant 0 : index
    %2 = vector.load %arg2[%c0_1, %c0_2] : memref<32x96xbf16, #tpu.memory_space<vmem>>, vector<32x96xbf16>
    %cst = arith.constant dense<0.000000e+00> : vector<8x96xf32>
    %3 = tpu.matmul %1, %2, %cst {dimension_numbers = #tpu.dot_dimension_numbers<[1], [0], [0], [1], [0, 0, 1, 1], [], []>} : vector<8x32xbf16>, vector<32x96xbf16>, vector<8x96xf32> -> vector<8x96xf32>
    %c0_3 = arith.constant 0 : index
    %c0_4 = arith.constant 0 : index
    %4 = vector.load %arg3[%c0_3, %c0_4] : memref<1x96xf32, #tpu.memory_space<vmem>>, vector<1x96xf32>
    %5 = vector.broadcast %4 : vector<1x96xf32> to vector<8x96xf32>
    %6 = arith.addf %3, %5 : vector<8x96xf32>
    %7 = vector.extract_strided_slice %6 {offsets = [0, 0], sizes = [8, 32], strides = [1, 1]} : vector<8x96xf32> to vector<8x32xf32>
    %8 = vector.shape_cast %7 : vector<8x32xf32> to vector<1x8x32xf32>
    %9 = vector.extract_strided_slice %6 {offsets = [0, 32], sizes = [8, 32], strides = [1, 1]} : vector<8x96xf32> to vector<8x32xf32>
    %10 = vector.shape_cast %9 : vector<8x32xf32> to vector<1x8x32xf32>
    %11 = vector.extract_strided_slice %6 {offsets = [0, 64], sizes = [8, 32], strides = [1, 1]} : vector<8x96xf32> to vector<8x32xf32>
    %12 = vector.shape_cast %11 : vector<8x32xf32> to vector<1x8x32xf32>
    %13 = vector.extract_strided_slice %8 {offsets = [0, 0, 0], sizes = [1, 8, 8], strides = [1, 1, 1]} : vector<1x8x32xf32> to vector<1x8x8xf32>
    %14 = arith.truncf %13 : vector<1x8x8xf32> to vector<1x8x8xbf16>
    %15 = vector.extract_strided_slice %10 {offsets = [0, 0, 0], sizes = [1, 8, 8], strides = [1, 1, 1]} : vector<1x8x32xf32> to vector<1x8x8xf32>
    %16 = arith.truncf %15 : vector<1x8x8xf32> to vector<1x8x8xbf16>
    %17 = vector.extract_strided_slice %12 {offsets = [0, 0, 0], sizes = [1, 8, 8], strides = [1, 1, 1]} : vector<1x8x32xf32> to vector<1x8x8xf32>
    %18 = arith.truncf %17 : vector<1x8x8xf32> to vector<1x8x8xbf16>
    "tpu.trace_start"() <{level = 10 : i32, message = "bld,bmd->blm"}> : () -> ()
    %cst_5 = arith.constant dense<0.000000e+00> : vector<1x8x8xf32>
    %19 = tpu.matmul %14, %16, %cst_5 {dimension_numbers = #tpu.dot_dimension_numbers<[2], [2], [1], [1], [0, 0, 0, 1, 1, 1], [0], [0]>} : vector<1x8x8xbf16>, vector<1x8x8xbf16>, vector<1x8x8xf32> -> vector<1x8x8xf32>
    "tpu.trace_stop"() : () -> ()
    %cst_6 = arith.constant dense<0xFF800000> : vector<1x8xf32>
    %20 = vector.multi_reduction <maximumf>, %19, %cst_6 [2] : vector<1x8x8xf32> to vector<1x8xf32>
    %21 = vector.shape_cast %20 : vector<1x8xf32> to vector<1x8x1xf32>
    %22 = vector.broadcast %21 : vector<1x8x1xf32> to vector<1x8x8xf32>
    %23 = arith.subf %19, %22 : vector<1x8x8xf32>
    %24 = math.exp %23 : vector<1x8x8xf32>
    %cst_7 = arith.constant dense<0.000000e+00> : vector<1x8xf32>
    %25 = vector.multi_reduction <add>, %24, %cst_7 [2] : vector<1x8x8xf32> to vector<1x8xf32>
    %26 = vector.shape_cast %25 : vector<1x8xf32> to vector<1x8x1xf32>
    %27 = arith.truncf %24 : vector<1x8x8xf32> to vector<1x8x8xbf16>
    "tpu.trace_start"() <{level = 10 : i32, message = "blm,bmd->bld"}> : () -> ()
    %cst_8 = arith.constant dense<0.000000e+00> : vector<1x8x8xf32>
    %28 = tpu.matmul %27, %18, %cst_8 {dimension_numbers = #tpu.dot_dimension_numbers<[2], [1], [1], [2], [0, 0, 0, 1, 1, 2], [0], [0]>} : vector<1x8x8xbf16>, vector<1x8x8xbf16>, vector<1x8x8xf32> -> vector<1x8x8xf32>
    "tpu.trace_stop"() : () -> ()
    %29 = tpu.reciprocal %26 {approx = true} : vector<1x8x1xf32> -> vector<1x8x1xf32>
    %30 = vector.broadcast %29 : vector<1x8x1xf32> to vector<1x8x8xf32>
    %31 = arith.mulf %28, %30 : vector<1x8x8xf32>
    %32 = vector.shape_cast %31 : vector<1x8x8xf32> to vector<8x8xf32>
    %33 = arith.truncf %32 : vector<8x8xf32> to vector<8x8xbf16>
    %c0_9 = arith.constant 0 : index
    %c0_10 = arith.constant 0 : index
    %34 = vector.load %arg15[%c0_9, %c0_10] : memref<8x32xbf16, #tpu.memory_space<vmem>>, vector<8x8xbf16>
    tpu.vector_store %arg15[%c0_9, %c0_10], %33 {strides = array<i32>} : memref<8x32xbf16, #tpu.memory_space<vmem>>, vector<8x8xbf16>,
    %35 = vector.extract_strided_slice %8 {offsets = [0, 0, 8], sizes = [1, 8, 8], strides = [1, 1, 1]} : vector<1x8x32xf32> to vector<1x8x8xf32>
    %36 = arith.truncf %35 : vector<1x8x8xf32> to vector<1x8x8xbf16>
    %37 = vector.extract_strided_slice %10 {offsets = [0, 0, 8], sizes = [1, 8, 8], strides = [1, 1, 1]} : vector<1x8x32xf32> to vector<1x8x8xf32>
    %38 = arith.truncf %37 : vector<1x8x8xf32> to vector<1x8x8xbf16>
    %39 = vector.extract_strided_slice %12 {offsets = [0, 0, 8], sizes = [1, 8, 8], strides = [1, 1, 1]} : vector<1x8x32xf32> to vector<1x8x8xf32>
    %40 = arith.truncf %39 : vector<1x8x8xf32> to vector<1x8x8xbf16>
    "tpu.trace_start"() <{level = 10 : i32, message = "bld,bmd->blm"}> : () -> ()
    %cst_11 = arith.constant dense<0.000000e+00> : vector<1x8x8xf32>
    %41 = tpu.matmul %36, %38, %cst_11 {dimension_numbers = #tpu.dot_dimension_numbers<[2], [2], [1], [1], [0, 0, 0, 1, 1, 1], [0], [0]>} : vector<1x8x8xbf16>, vector<1x8x8xbf16>, vector<1x8x8xf32> -> vector<1x8x8xf32>
    "tpu.trace_stop"() : () -> ()
    %cst_12 = arith.constant dense<0xFF800000> : vector<1x8xf32>
    %42 = vector.multi_reduction <maximumf>, %41, %cst_12 [2] : vector<1x8x8xf32> to vector<1x8xf32>
    %43 = vector.shape_cast %42 : vector<1x8xf32> to vector<1x8x1xf32>
    %44 = vector.broadcast %43 : vector<1x8x1xf32> to vector<1x8x8xf32>
    %45 = arith.subf %41, %44 : vector<1x8x8xf32>
    %46 = math.exp %45 : vector<1x8x8xf32>
    %cst_13 = arith.constant dense<0.000000e+00> : vector<1x8xf32>
    %47 = vector.multi_reduction <add>, %46, %cst_13 [2] : vector<1x8x8xf32> to vector<1x8xf32>
    %48 = vector.shape_cast %47 : vector<1x8xf32> to vector<1x8x1xf32>
    %49 = arith.truncf %46 : vector<1x8x8xf32> to vector<1x8x8xbf16>
    "tpu.trace_start"() <{level = 10 : i32, message = "blm,bmd->bld"}> : () -> ()
    %cst_14 = arith.constant dense<0.000000e+00> : vector<1x8x8xf32>
    %50 = tpu.matmul %49, %40, %cst_14 {dimension_numbers = #tpu.dot_dimension_numbers<[2], [1], [1], [2], [0, 0, 0, 1, 1, 2], [0], [0]>} : vector<1x8x8xbf16>, vector<1x8x8xbf16>, vector<1x8x8xf32> -> vector<1x8x8xf32>
    "tpu.trace_stop"() : () -> ()
    %51 = tpu.reciprocal %48 {approx = true} : vector<1x8x1xf32> -> vector<1x8x1xf32>
    %52 = vector.broadcast %51 : vector<1x8x1xf32> to vector<1x8x8xf32>
    %53 = arith.mulf %50, %52 : vector<1x8x8xf32>
    %54 = vector.shape_cast %53 : vector<1x8x8xf32> to vector<8x8xf32>
    %55 = arith.truncf %54 : vector<8x8xf32> to vector<8x8xbf16>
    %c0_15 = arith.constant 0 : index
    %c8 = arith.constant 8 : index
    %56 = vector.load %arg15[%c0_15, %c8] : memref<8x32xbf16, #tpu.memory_space<vmem>>, vector<8x8xbf16>
    tpu.vector_store %arg15[%c0_15, %c8], %55 {strides = array<i32>} : memref<8x32xbf16, #tpu.memory_space<vmem>>, vector<8x8xbf16>,
    %57 = vector.extract_strided_slice %8 {offsets = [0, 0, 16], sizes = [1, 8, 8], strides = [1, 1, 1]} : vector<1x8x32xf32> to vector<1x8x8xf32>
    %58 = arith.truncf %57 : vector<1x8x8xf32> to vector<1x8x8xbf16>
    %59 = vector.extract_strided_slice %10 {offsets = [0, 0, 16], sizes = [1, 8, 8], strides = [1, 1, 1]} : vector<1x8x32xf32> to vector<1x8x8xf32>
    %60 = arith.truncf %59 : vector<1x8x8xf32> to vector<1x8x8xbf16>
    %61 = vector.extract_strided_slice %12 {offsets = [0, 0, 16], sizes = [1, 8, 8], strides = [1, 1, 1]} : vector<1x8x32xf32> to vector<1x8x8xf32>
    %62 = arith.truncf %61 : vector<1x8x8xf32> to vector<1x8x8xbf16>
    "tpu.trace_start"() <{level = 10 : i32, message = "bld,bmd->blm"}> : () -> ()
    %cst_16 = arith.constant dense<0.000000e+00> : vector<1x8x8xf32>
    %63 = tpu.matmul %58, %60, %cst_16 {dimension_numbers = #tpu.dot_dimension_numbers<[2], [2], [1], [1], [0, 0, 0, 1, 1, 1], [0], [0]>} : vector<1x8x8xbf16>, vector<1x8x8xbf16>, vector<1x8x8xf32> -> vector<1x8x8xf32>
    "tpu.trace_stop"() : () -> ()
    %cst_17 = arith.constant dense<0xFF800000> : vector<1x8xf32>
    %64 = vector.multi_reduction <maximumf>, %63, %cst_17 [2] : vector<1x8x8xf32> to vector<1x8xf32>
    %65 = vector.shape_cast %64 : vector<1x8xf32> to vector<1x8x1xf32>
    %66 = vector.broadcast %65 : vector<1x8x1xf32> to vector<1x8x8xf32>
    %67 = arith.subf %63, %66 : vector<1x8x8xf32>
    %68 = math.exp %67 : vector<1x8x8xf32>
    %cst_18 = arith.constant dense<0.000000e+00> : vector<1x8xf32>
    %69 = vector.multi_reduction <add>, %68, %cst_18 [2] : vector<1x8x8xf32> to vector<1x8xf32>
    %70 = vector.shape_cast %69 : vector<1x8xf32> to vector<1x8x1xf32>
    %71 = arith.truncf %68 : vector<1x8x8xf32> to vector<1x8x8xbf16>
    "tpu.trace_start"() <{level = 10 : i32, message = "blm,bmd->bld"}> : () -> ()
    %cst_19 = arith.constant dense<0.000000e+00> : vector<1x8x8xf32>
    %72 = tpu.matmul %71, %62, %cst_19 {dimension_numbers = #tpu.dot_dimension_numbers<[2], [1], [1], [2], [0, 0, 0, 1, 1, 2], [0], [0]>} : vector<1x8x8xbf16>, vector<1x8x8xbf16>, vector<1x8x8xf32> -> vector<1x8x8xf32>
    "tpu.trace_stop"() : () -> ()
    %73 = tpu.reciprocal %70 {approx = true} : vector<1x8x1xf32> -> vector<1x8x1xf32>
    %74 = vector.broadcast %73 : vector<1x8x1xf32> to vector<1x8x8xf32>
    %75 = arith.mulf %72, %74 : vector<1x8x8xf32>
    %76 = vector.shape_cast %75 : vector<1x8x8xf32> to vector<8x8xf32>
    %77 = arith.truncf %76 : vector<8x8xf32> to vector<8x8xbf16>
    %c0_20 = arith.constant 0 : index
    %c16 = arith.constant 16 : index
    %78 = vector.load %arg15[%c0_20, %c16] : memref<8x32xbf16, #tpu.memory_space<vmem>>, vector<8x8xbf16>
    tpu.vector_store %arg15[%c0_20, %c16], %77 {strides = array<i32>} : memref<8x32xbf16, #tpu.memory_space<vmem>>, vector<8x8xbf16>,
    %79 = vector.extract_strided_slice %8 {offsets = [0, 0, 24], sizes = [1, 8, 8], strides = [1, 1, 1]} : vector<1x8x32xf32> to vector<1x8x8xf32>
    %80 = arith.truncf %79 : vector<1x8x8xf32> to vector<1x8x8xbf16>
    %81 = vector.extract_strided_slice %10 {offsets = [0, 0, 24], sizes = [1, 8, 8], strides = [1, 1, 1]} : vector<1x8x32xf32> to vector<1x8x8xf32>
    %82 = arith.truncf %81 : vector<1x8x8xf32> to vector<1x8x8xbf16>
    %83 = vector.extract_strided_slice %12 {offsets = [0, 0, 24], sizes = [1, 8, 8], strides = [1, 1, 1]} : vector<1x8x32xf32> to vector<1x8x8xf32>
    %84 = arith.truncf %83 : vector<1x8x8xf32> to vector<1x8x8xbf16>
    "tpu.trace_start"() <{level = 10 : i32, message = "bld,bmd->blm"}> : () -> ()
    %cst_21 = arith.constant dense<0.000000e+00> : vector<1x8x8xf32>
    %85 = tpu.matmul %80, %82, %cst_21 {dimension_numbers = #tpu.dot_dimension_numbers<[2], [2], [1], [1], [0, 0, 0, 1, 1, 1], [0], [0]>} : vector<1x8x8xbf16>, vector<1x8x8xbf16>, vector<1x8x8xf32> -> vector<1x8x8xf32>
    "tpu.trace_stop"() : () -> ()
    %cst_22 = arith.constant dense<0xFF800000> : vector<1x8xf32>
    %86 = vector.multi_reduction <maximumf>, %85, %cst_22 [2] : vector<1x8x8xf32> to vector<1x8xf32>
    %87 = vector.shape_cast %86 : vector<1x8xf32> to vector<1x8x1xf32>
    %88 = vector.broadcast %87 : vector<1x8x1xf32> to vector<1x8x8xf32>
    %89 = arith.subf %85, %88 : vector<1x8x8xf32>
    %90 = math.exp %89 : vector<1x8x8xf32>
    %cst_23 = arith.constant dense<0.000000e+00> : vector<1x8xf32>
    %91 = vector.multi_reduction <add>, %90, %cst_23 [2] : vector<1x8x8xf32> to vector<1x8xf32>
    %92 = vector.shape_cast %91 : vector<1x8xf32> to vector<1x8x1xf32>
    %93 = arith.truncf %90 : vector<1x8x8xf32> to vector<1x8x8xbf16>
    "tpu.trace_start"() <{level = 10 : i32, message = "blm,bmd->bld"}> : () -> ()
    %cst_24 = arith.constant dense<0.000000e+00> : vector<1x8x8xf32>
    %94 = tpu.matmul %93, %84, %cst_24 {dimension_numbers = #tpu.dot_dimension_numbers<[2], [1], [1], [2], [0, 0, 0, 1, 1, 2], [0], [0]>} : vector<1x8x8xbf16>, vector<1x8x8xbf16>, vector<1x8x8xf32> -> vector<1x8x8xf32>
    "tpu.trace_stop"() : () -> ()
    %95 = tpu.reciprocal %92 {approx = true} : vector<1x8x1xf32> -> vector<1x8x1xf32>
    %96 = vector.broadcast %95 : vector<1x8x1xf32> to vector<1x8x8xf32>
    %97 = arith.mulf %94, %96 : vector<1x8x8xf32>
    %98 = vector.shape_cast %97 : vector<1x8x8xf32> to vector<8x8xf32>
    %99 = arith.truncf %98 : vector<8x8xf32> to vector<8x8xbf16>
    %c0_25 = arith.constant 0 : index
    %c24 = arith.constant 24 : index
    %100 = vector.load %arg15[%c0_25, %c24] : memref<8x32xbf16, #tpu.memory_space<vmem>>, vector<8x8xbf16>
    tpu.vector_store %arg15[%c0_25, %c24], %99 {strides = array<i32>} : memref<8x32xbf16, #tpu.memory_space<vmem>>, vector<8x8xbf16>,
    %c0_26 = arith.constant 0 : index
    %c0_27 = arith.constant 0 : index
    %101 = vector.load %arg15[%c0_26, %c0_27] : memref<8x32xbf16, #tpu.memory_space<vmem>>, vector<8x32xbf16>
    %c0_28 = arith.constant 0 : index
    %c0_29 = arith.constant 0 : index
    %102 = vector.load %arg4[%c0_28, %c0_29] : memref<32x32xbf16, #tpu.memory_space<vmem>>, vector<32x32xbf16>
    %cst_30 = arith.constant dense<0.000000e+00> : vector<8x32xf32>
    %103 = tpu.matmul %101, %102, %cst_30 {dimension_numbers = #tpu.dot_dimension_numbers<[1], [0], [0], [1], [0, 0, 1, 1], [], []>} : vector<8x32xbf16>, vector<32x32xbf16>, vector<8x32xf32> -> vector<8x32xf32>
    %c0_31 = arith.constant 0 : index
    %c0_32 = arith.constant 0 : index
    %104 = vector.load %arg5[%c0_31, %c0_32] : memref<1x32xf32, #tpu.memory_space<vmem>>, vector<1x32xf32>
    %105 = vector.broadcast %104 : vector<1x32xf32> to vector<8x32xf32>
    %106 = arith.addf %103, %105 : vector<8x32xf32>
    %107 = arith.addf %0, %106 : vector<8x32xf32>
    %cst_33 = arith.constant dense<0.000000e+00> : vector<8xf32>
    %108 = vector.multi_reduction <add>, %107, %cst_33 [1] : vector<8x32xf32> to vector<8xf32>
    %109 = vector.shape_cast %108 : vector<8xf32> to vector<8x1xf32>
    %cst_34 = arith.constant 3.200000e+01 : f32
    %110 = vector.broadcast %cst_34 : f32 to vector<8x1xf32>
    %111 = arith.divf %109, %110 : vector<8x1xf32>
    %112 = vector.broadcast %111 : vector<8x1xf32> to vector<8x32xf32>
    %113 = arith.subf %107, %112 : vector<8x32xf32>
    %114 = arith.mulf %113, %113 : vector<8x32xf32>
    %cst_35 = arith.constant dense<0.000000e+00> : vector<8xf32>
    %115 = vector.multi_reduction <add>, %114, %cst_35 [1] : vector<8x32xf32> to vector<8xf32>
    %116 = vector.shape_cast %115 : vector<8xf32> to vector<8x1xf32>
    %cst_36 = arith.constant 3.200000e+01 : f32
    %117 = vector.broadcast %cst_36 : f32 to vector<8x1xf32>
    %118 = arith.divf %116, %117 : vector<8x1xf32>
    %cst_37 = arith.constant 9.99999974E-6 : f32
    %119 = vector.broadcast %cst_37 : f32 to vector<8x1xf32>
    %120 = arith.addf %118, %119 : vector<8x1xf32>
    %121 = math.rsqrt %120 : vector<8x1xf32>
    %122 = vector.broadcast %121 : vector<8x1xf32> to vector<8x32xf32>
    %123 = arith.mulf %113, %122 : vector<8x32xf32>
    %c0_38 = arith.constant 0 : index
    %c0_39 = arith.constant 0 : index
    %124 = vector.load %arg6[%c0_38, %c0_39] : memref<1x32xf32, #tpu.memory_space<vmem>>, vector<1x32xf32>
    %125 = vector.broadcast %124 : vector<1x32xf32> to vector<8x32xf32>
    %126 = arith.mulf %123, %125 : vector<8x32xf32>
    %c0_40 = arith.constant 0 : index
    %c0_41 = arith.constant 0 : index
    %127 = vector.load %arg7[%c0_40, %c0_41] : memref<1x32xf32, #tpu.memory_space<vmem>>, vector<1x32xf32>
    %128 = vector.broadcast %127 : vector<1x32xf32> to vector<8x32xf32>
    %129 = arith.addf %126, %128 : vector<8x32xf32>
    %130 = arith.truncf %129 : vector<8x32xf32> to vector<8x32xbf16>
    %c0_42 = arith.constant 0 : index
    %c0_43 = arith.constant 0 : index
    %131 = vector.load %arg8[%c0_42, %c0_43] : memref<32x64xbf16, #tpu.memory_space<vmem>>, vector<32x64xbf16>
    %cst_44 = arith.constant dense<0.000000e+00> : vector<8x64xf32>
    %132 = tpu.matmul %130, %131, %cst_44 {dimension_numbers = #tpu.dot_dimension_numbers<[1], [0], [0], [1], [0, 0, 1, 1], [], []>} : vector<8x32xbf16>, vector<32x64xbf16>, vector<8x64xf32> -> vector<8x64xf32>
    %c0_45 = arith.constant 0 : index
    %c0_46 = arith.constant 0 : index
    %133 = vector.load %arg9[%c0_45, %c0_46] : memref<1x64xf32, #tpu.memory_space<vmem>>, vector<1x64xf32>
    %134 = vector.broadcast %133 : vector<1x64xf32> to vector<8x64xf32>
    %135 = arith.addf %132, %134 : vector<8x64xf32>
    %cst_47 = arith.constant 0.000000e+00 : f32
    %136 = vector.broadcast %cst_47 : f32 to vector<8x64xf32>
    %137 = arith.maximumf %135, %136 : vector<8x64xf32>
    %138 = arith.truncf %137 : vector<8x64xf32> to vector<8x64xbf16>
    %c0_48 = arith.constant 0 : index
    %c0_49 = arith.constant 0 : index
    %139 = vector.load %arg10[%c0_48, %c0_49] : memref<64x32xbf16, #tpu.memory_space<vmem>>, vector<64x32xbf16>
    %cst_50 = arith.constant dense<0.000000e+00> : vector<8x32xf32>
    %140 = tpu.matmul %138, %139, %cst_50 {dimension_numbers = #tpu.dot_dimension_numbers<[1], [0], [0], [1], [0, 0, 1, 1], [], []>} : vector<8x64xbf16>, vector<64x32xbf16>, vector<8x32xf32> -> vector<8x32xf32>
    %c0_51 = arith.constant 0 : index
    %c0_52 = arith.constant 0 : index
    %141 = vector.load %arg11[%c0_51, %c0_52] : memref<1x32xf32, #tpu.memory_space<vmem>>, vector<1x32xf32>
    %142 = vector.broadcast %141 : vector<1x32xf32> to vector<8x32xf32>
    %143 = arith.addf %140, %142 : vector<8x32xf32>
    %144 = arith.addf %129, %143 : vector<8x32xf32>
    %cst_53 = arith.constant dense<0.000000e+00> : vector<8xf32>
    %145 = vector.multi_reduction <add>, %144, %cst_53 [1] : vector<8x32xf32> to vector<8xf32>
    %146 = vector.shape_cast %145 : vector<8xf32> to vector<8x1xf32>
    %cst_54 = arith.constant 3.200000e+01 : f32
    %147 = vector.broadcast %cst_54 : f32 to vector<8x1xf32>
    %148 = arith.divf %146, %147 : vector<8x1xf32>
    %149 = vector.broadcast %148 : vector<8x1xf32> to vector<8x32xf32>
    %150 = arith.subf %144, %149 : vector<8x32xf32>
    %151 = arith.mulf %150, %150 : vector<8x32xf32>
    %cst_55 = arith.constant dense<0.000000e+00> : vector<8xf32>
    %152 = vector.multi_reduction <add>, %151, %cst_55 [1] : vector<8x32xf32> to vector<8xf32>
    %153 = vector.shape_cast %152 : vector<8xf32> to vector<8x1xf32>
    %cst_56 = arith.constant 3.200000e+01 : f32
    %154 = vector.broadcast %cst_56 : f32 to vector<8x1xf32>
    %155 = arith.divf %153, %154 : vector<8x1xf32>
    %cst_57 = arith.constant 9.99999974E-6 : f32
    %156 = vector.broadcast %cst_57 : f32 to vector<8x1xf32>
    %157 = arith.addf %155, %156 : vector<8x1xf32>
    %158 = math.rsqrt %157 : vector<8x1xf32>
    %159 = vector.broadcast %158 : vector<8x1xf32> to vector<8x32xf32>
    %160 = arith.mulf %150, %159 : vector<8x32xf32>
    %c0_58 = arith.constant 0 : index
    %c0_59 = arith.constant 0 : index
    %161 = vector.load %arg12[%c0_58, %c0_59] : memref<1x32xf32, #tpu.memory_space<vmem>>, vector<1x32xf32>
    %162 = vector.broadcast %161 : vector<1x32xf32> to vector<8x32xf32>
    %163 = arith.mulf %160, %162 : vector<8x32xf32>
    %c0_60 = arith.constant 0 : index
    %c0_61 = arith.constant 0 : index
    %164 = vector.load %arg13[%c0_60, %c0_61] : memref<1x32xf32, #tpu.memory_space<vmem>>, vector<1x32xf32>
    %165 = vector.broadcast %164 : vector<1x32xf32> to vector<8x32xf32>
    %166 = arith.addf %163, %165 : vector<8x32xf32>
    %c0_62 = arith.constant 0 : index
    %c0_63 = arith.constant 0 : index
    %167 = vector.load %arg14[%c0_62, %c0_63] : memref<8x32xf32, #tpu.memory_space<vmem>>, vector<8x32xf32>
    tpu.vector_store %arg14[%c0_62, %c0_63], %166 {strides = array<i32>} : memref<8x32xf32, #tpu.memory_space<vmem>>, vector<8x32xf32>,
    return
  }
  func.func @transform_0(%arg0: i32) -> (i32, i32) {
    %c0_i32 = arith.constant 0 : i32
    %c0_i32_0 = arith.constant 0 : i32
    return %arg0, %c0_i32 : i32, i32
  }
  func.func @transform_1(%arg0: i32) -> (i32, i32) {
    %c0_i32 = arith.constant 0 : i32
    %c0_i32_0 = arith.constant 0 : i32
    %c0_i32_1 = arith.constant 0 : i32
    return %c0_i32, %c0_i32_0 : i32, i32
  }
  func.func @transform_2(%arg0: i32) -> (i32, i32) {
    %c0_i32 = arith.constant 0 : i32
    %c0_i32_0 = arith.constant 0 : i32
    %c0_i32_1 = arith.constant 0 : i32
    return %c0_i32, %c0_i32_0 : i32, i32
  }
  func.func @transform_3(%arg0: i32) -> (i32, i32) {
    %c0_i32 = arith.constant 0 : i32
    %c0_i32_0 = arith.constant 0 : i32
    %c0_i32_1 = arith.constant 0 : i32
    return %c0_i32, %c0_i32_0 : i32, i32
  }
  func.func @transform_4(%arg0: i32) -> (i32, i32) {
    %c0_i32 = arith.constant 0 : i32
    %c0_i32_0 = arith.constant 0 : i32
    %c0_i32_1 = arith.constant 0 : i32
    return %c0_i32, %c0_i32_0 : i32, i32
  }
  func.func @transform_5(%arg0: i32) -> (i32, i32) {
    %c0_i32 = arith.constant 0 : i32
    %c0_i32_0 = arith.constant 0 : i32
    %c0_i32_1 = arith.constant 0 : i32
    return %c0_i32, %c0_i32_0 : i32, i32
  }
  func.func @transform_6(%arg0: i32) -> (i32, i32) {
    %c0_i32 = arith.constant 0 : i32
    %c0_i32_0 = arith.constant 0 : i32
    %c0_i32_1 = arith.constant 0 : i32
    return %c0_i32, %c0_i32_0 : i32, i32
  }
  func.func @transform_7(%arg0: i32) -> (i32, i32) {
    %c0_i32 = arith.constant 0 : i32
    %c0_i32_0 = arith.constant 0 : i32
    %c0_i32_1 = arith.constant 0 : i32
    return %c0_i32, %c0_i32_0 : i32, i32
  }
  func.func @transform_8(%arg0: i32) -> (i32, i32) {
    %c0_i32 = arith.constant 0 : i32
    %c0_i32_0 = arith.constant 0 : i32
    %c0_i32_1 = arith.constant 0 : i32
    return %c0_i32, %c0_i32_0 : i32, i32
  }
  func.func @transform_9(%arg0: i32) -> (i32, i32) {
    %c0_i32 = arith.constant 0 : i32
    %c0_i32_0 = arith.constant 0 : i32
    %c0_i32_1 = arith.constant 0 : i32
    return %c0_i32, %c0_i32_0 : i32, i32
  }
  func.func @transform_10(%arg0: i32) -> (i32, i32) {
    %c0_i32 = arith.constant 0 : i32
    %c0_i32_0 = arith.constant 0 : i32
    %c0_i32_1 = arith.constant 0 : i32
    return %c0_i32, %c0_i32_0 : i32, i32
  }
  func.func @transform_11(%arg0: i32) -> (i32, i32) {
    %c0_i32 = arith.constant 0 : i32
    %c0_i32_0 = arith.constant 0 : i32
    %c0_i32_1 = arith.constant 0 : i32
    return %c0_i32, %c0_i32_0 : i32, i32
  }
  func.func @transform_12(%arg0: i32) -> (i32, i32) {
    %c0_i32 = arith.constant 0 : i32
    %c0_i32_0 = arith.constant 0 : i32
    %c0_i32_1 = arith.constant 0 : i32
    return %c0_i32, %c0_i32_0 : i32, i32
  }
  func.func @transform_13(%arg0: i32) -> (i32, i32) {
    %c0_i32 = arith.constant 0 : i32
    %c0_i32_0 = arith.constant 0 : i32
    return %arg0, %c0_i32 : i32, i32
  }
}

</mosaic_0001>

<llo_original>
// kernel: tpu_custom_call.1
$region0: #{tpu_custom_call.1}
  #allocation0 [shape = 'u32[]', space=smem, size = 0x4, offset = 0x4, fixed_abs, tag = 'smem constant byte address 0x4 - core index']
  #allocation1 [shape = 'u32[144,128]{1,0:T(1,128)}', space=vmem, size = 0x12000, scoped, tag = 'internal scratch']
  #allocation2 [shape = 'bf16[8,32]{1,0:T(8,128)(2,1)}', space=vmem, size = 0x800, scoped, tag = 'scratch operand']
  %s0 = inlined_call_operand.vmem [shape: f32[16,32], index: 0, kind: input, shape index: {}]
  %s1 = inlined_call_operand.vmem [shape: bf16[32,96], index: 1, kind: input, shape index: {}]
  %s2 = inlined_call_operand.vmem [shape: f32[1,96], index: 2, kind: input, shape index: {}]
  %s3 = inlined_call_operand.vmem [shape: bf16[32,32], index: 3, kind: input, shape index: {}]
  %s4 = inlined_call_operand.vmem [shape: f32[1,32], index: 4, kind: input, shape index: {}]
  %s5 = inlined_call_operand.vmem [shape: f32[1,32], index: 5, kind: input, shape index: {}]
  %s6 = inlined_call_operand.vmem [shape: f32[1,32], index: 6, kind: input, shape index: {}]
  %s7 = inlined_call_operand.hbm [shape: bf16[32,64], index: 7, kind: input, shape index: {}]
  %s8 = inlined_call_operand.vmem [shape: f32[1,64], index: 8, kind: input, shape index: {}]
  %s9 = inlined_call_operand.vmem [shape: bf16[64,32], index: 9, kind: input, shape index: {}]
  %s10 = inlined_call_operand.vmem [shape: f32[1,32], index: 10, kind: input, shape index: {}]
  %s11 = inlined_call_operand.vmem [shape: f32[1,32], index: 11, kind: input, shape index: {}]
  %s12 = inlined_call_operand.vmem [shape: f32[1,32], index: 12, kind: input, shape index: {}]
  %s13 = inlined_call_operand.hbm [shape: f32[16,32], index: 13, kind: output, shape index: {}]
  %s14 = sld [smem:[#allocation0]]
  $region89: #{tpu_custom_call.1} parent=0
    _
  %s16 = ssub.s32 1, %s14
  %s17 = scalar_select 0, %s16, %s14
  $region1: #{tpu_custom_call.1} parent=0
    #allocation3 [shape = 'u8[8192]{0}', space=vmem, size = 0x2000, scoped, tag = 'input window, operand 7, single buffered']
    #allocation4 [shape = 's32[2]{0}', space=sflag, size = 0x8, scoped, tag = 'scoped memory for tpu_custom_call.1']
    #allocation5 [shape = 's32[2]{0}', space=sflag, size = 0x8, scoped, tag = 'scoped memory for tpu_custom_call.1']
    #allocation6 [shape = 'u8[8192]{0}', space=vmem, size = 0x2000, scoped, tag = 'output window, operand 0']
    %18 = vsyncpa [#allocation4], 0
    %19 = vsyncpa [#allocation5], 0
    %s20 = scalar_lea.sflag [#allocation5], 1
    %21 = vsyncpa %s20, 0
    loop: start=0, step=1, limit=4
    $region2: #{tpu_custom_call.1} parent=1 // loop_pre_header
      _
    $region3: #{tpu_custom_call.1} parent=1 // loop_header
      %s23 = sphi 0, %s27
      %p24 = scmp.ge.s32.totalorder %s23, 4
      %s33 = sphi 0, %s35
      %s36 = sphi 0, %s33
      %s37 = sphi 0, %s36
      %s53 = sphi 0, %s37
      %s57 = sphi 0, %s57
      %s59 = sphi 0, %s57
      %s60 = sphi 0, %s59
      %s74 = sphi 0, %s60
      %s78 = sphi 0, %s78
      %s80 = sphi 0, %s78
      %s81 = sphi 0, %s80
      %s95 = sphi 0, %s81
      %s99 = sphi 0, %s99
      %s101 = sphi 0, %s99
      %s102 = sphi 0, %s101
      %s116 = sphi 0, %s102
      %s120 = sphi 0, %s120
      %s122 = sphi 0, %s120
      %s123 = sphi 0, %s122
      %s137 = sphi 0, %s123
      %s141 = sphi 0, %s141
      %s143 = sphi 0, %s141
      %s144 = sphi 0, %s143
      %s158 = sphi 0, %s144
      %s162 = sphi 0, %s162
      %s164 = sphi 0, %s162
      %s165 = sphi 0, %s164
      %s179 = sphi 0, %s165
      %s183 = sphi 0, %s183
      %s185 = sphi 0, %s183
      %s186 = sphi 0, %s185
      %s200 = sphi 0, %s186
      %s204 = sphi 0, %s204
      %s206 = sphi 0, %s204
      %s207 = sphi 0, %s206
      %s221 = sphi 0, %s207
      %s225 = sphi 0, %s225
      %s227 = sphi 0, %s225
      %s228 = sphi 0, %s227
      %s242 = sphi 0, %s228
      %s246 = sphi 0, %s246
      %s248 = sphi 0, %s246
      %s249 = sphi 0, %s248
      %s263 = sphi 0, %s249
      %s267 = sphi 0, %s267
      %s269 = sphi 0, %s267
      %s270 = sphi 0, %s269
      %s284 = sphi 0, %s270
      %s288 = sphi 0, %s288
      %s290 = sphi 0, %s288
      %s291 = sphi 0, %s290
      %s305 = sphi 0, %s291
      %s311 = sphi 0, %s313
      %s314 = sphi 0, %s311
      %s315 = sphi 0, %s314
      %s331 = sphi 0, %s315
    $region4: #{tpu_custom_call.1} parent=1 // loop_header_branch
      %26 = sbr.rel (%p24) target = $region8
    $region5: #{tpu_custom_call.1} parent=1 // loop_body
      %s28 = ssub.s32 %s23, 1
      %s29 = ssub.s32 %s23, 2
      %s30 = sadd.s32 %s23, 1
      %s31 = ssub.s32 %s23, %s30
      %p32 = scmp.eq.s32.totalorder %s31, 0
      %s34 = sadd.s32 %s33, 1
      %s35 = scalar_select %p32, %s33, %s34
      %p38 = pneg %p32
      %p39 = scmp.eq.s32.totalorder %s23, 1
      %p40 = por %p38, %p39
      %p41 = scmp.ne.s32.totalorder %s33, %s36
      %p42 = scmp.eq.s32.totalorder %s23, 0
      %p43 = por %p41, %p42
      %p44 = scmp.ne.s32.totalorder %s33, %s36
      %p45 = scmp.eq.s32.totalorder %s28, 1
      %p46 = por %p44, %p45
      %p47 = scmp.ne.s32.totalorder %s36, %s37
      %p48 = scmp.eq.s32.totalorder %s28, 0
      %p49 = por %p47, %p48
      %p50 = scmp.ne.s32.totalorder %s36, %s37
      %p51 = scmp.eq.s32.totalorder %s29, 1
      %p52 = por %p50, %p51
      %p54 = scmp.ne.s32.totalorder %s37, %s53
      %p55 = scmp.eq.s32.totalorder %s29, 0
      %p56 = por %p54, %p55
      %s58 = sadd.s32 %s57, 1
      %p61 = scmp.eq.s32.totalorder %s23, 1
      %p62 = scmp.ne.s32.totalorder %s57, %s59
      %p63 = scmp.eq.s32.totalorder %s23, 0
      %p64 = por %p62, %p63
      %p65 = scmp.ne.s32.totalorder %s57, %s59
      %p66 = scmp.eq.s32.totalorder %s28, 1
      %p67 = por %p65, %p66
      %p68 = scmp.ne.s32.totalorder %s59, %s60
      %p69 = scmp.eq.s32.totalorder %s28, 0
      %p70 = por %p68, %p69
      %p71 = scmp.ne.s32.totalorder %s59, %s60
      %p72 = scmp.eq.s32.totalorder %s29, 1
      %p73 = por %p71, %p72
      %p75 = scmp.ne.s32.totalorder %s60, %s74
      %p76 = scmp.eq.s32.totalorder %s29, 0
      %p77 = por %p75, %p76
      %s79 = sadd.s32 %s78, 1
      %p82 = scmp.eq.s32.totalorder %s23, 1
      %p83 = scmp.ne.s32.totalorder %s78, %s80
      %p84 = scmp.eq.s32.totalorder %s23, 0
      %p85 = por %p83, %p84
      %p86 = scmp.ne.s32.totalorder %s78, %s80
      %p87 = scmp.eq.s32.totalorder %s28, 1
      %p88 = por %p86, %p87
      %p89 = scmp.ne.s32.totalorder %s80, %s81
      %p90 = scmp.eq.s32.totalorder %s28, 0
      %p91 = por %p89, %p90
      %p92 = scmp.ne.s32.totalorder %s80, %s81
      %p93 = scmp.eq.s32.totalorder %s29, 1
      %p94 = por %p92, %p93
      %p96 = scmp.ne.s32.totalorder %s81, %s95
      %p97 = scmp.eq.s32.totalorder %s29, 0
      %p98 = por %p96, %p97
      %s100 = sadd.s32 %s99, 1
      %p103 = scmp.eq.s32.totalorder %s23, 1
      %p104 = scmp.ne.s32.totalorder %s99, %s101
      %p105 = scmp.eq.s32.totalorder %s23, 0
      %p106 = por %p104, %p105
      %p107 = scmp.ne.s32.totalorder %s99, %s101
      %p108 = scmp.eq.s32.totalorder %s28, 1
      %p109 = por %p107, %p108
      %p110 = scmp.ne.s32.totalorder %s101, %s102
      %p111 = scmp.eq.s32.totalorder %s28, 0
      %p112 = por %p110, %p111
      %p113 = scmp.ne.s32.totalorder %s101, %s102
      %p114 = scmp.eq.s32.totalorder %s29, 1
      %p115 = por %p113, %p114
      %p117 = scmp.ne.s32.totalorder %s102, %s116
      %p118 = scmp.eq.s32.totalorder %s29, 0
      %p119 = por %p117, %p118
      %s121 = sadd.s32 %s120, 1
      %p124 = scmp.eq.s32.totalorder %s23, 1
      %p125 = scmp.ne.s32.totalorder %s120, %s122
      %p126 = scmp.eq.s32.totalorder %s23, 0
      %p127 = por %p125, %p126
      %p128 = scmp.ne.s32.totalorder %s120, %s122
      %p129 = scmp.eq.s32.totalorder %s28, 1
      %p130 = por %p128, %p129
      %p131 = scmp.ne.s32.totalorder %s122, %s123
      %p132 = scmp.eq.s32.totalorder %s28, 0
      %p133 = por %p131, %p132
      %p134 = scmp.ne.s32.totalorder %s122, %s123
      %p135 = scmp.eq.s32.totalorder %s29, 1
      %p136 = por %p134, %p135
      %p138 = scmp.ne.s32.totalorder %s123, %s137
      %p139 = scmp.eq.s32.totalorder %s29, 0
      %p140 = por %p138, %p139
      %s142 = sadd.s32 %s141, 1
      %p145 = scmp.eq.s32.totalorder %s23, 1
      %p146 = scmp.ne.s32.totalorder %s141, %s143
      %p147 = scmp.eq.s32.totalorder %s23, 0
      %p148 = por %p146, %p147
      %p149 = scmp.ne.s32.totalorder %s141, %s143
      %p150 = scmp.eq.s32.totalorder %s28, 1
      %p151 = por %p149, %p150
      %p152 = scmp.ne.s32.totalorder %s143, %s144
      %p153 = scmp.eq.s32.totalorder %s28, 0
      %p154 = por %p152, %p153
      %p155 = scmp.ne.s32.totalorder %s143, %s144
      %p156 = scmp.eq.s32.totalorder %s29, 1
      %p157 = por %p155, %p156
      %p159 = scmp.ne.s32.totalorder %s144, %s158
      %p160 = scmp.eq.s32.totalorder %s29, 0
      %p161 = por %p159, %p160
      %s163 = sadd.s32 %s162, 1
      %p166 = scmp.eq.s32.totalorder %s23, 1
      %p167 = scmp.ne.s32.totalorder %s162, %s164
      %p168 = scmp.eq.s32.totalorder %s23, 0
      %p169 = por %p167, %p168
      %p170 = scmp.ne.s32.totalorder %s162, %s164
      %p171 = scmp.eq.s32.totalorder %s28, 1
      %p172 = por %p170, %p171
      %p173 = scmp.ne.s32.totalorder %s164, %s165
      %p174 = scmp.eq.s32.totalorder %s28, 0
      %p175 = por %p173, %p174
      %p176 = scmp.ne.s32.totalorder %s164, %s165
      %p177 = scmp.eq.s32.totalorder %s29, 1
      %p178 = por %p176, %p177
      %p180 = scmp.ne.s32.totalorder %s165, %s179
      %p181 = scmp.eq.s32.totalorder %s29, 0
      %p182 = por %p180, %p181
      %s184 = sadd.s32 %s183, 1
      %p187 = scmp.eq.s32.totalorder %s23, 1
      %p188 = scmp.ne.s32.totalorder %s183, %s185
      %p189 = scmp.eq.s32.totalorder %s23, 0
      %p190 = por %p188, %p189
      %p191 = scmp.ne.s32.totalorder %s183, %s185
      %p192 = scmp.eq.s32.totalorder %s28, 1
      %p193 = por %p191, %p192
      %p194 = scmp.ne.s32.totalorder %s185, %s186
      %p195 = scmp.eq.s32.totalorder %s28, 0
      %p196 = por %p194, %p195
      %p197 = scmp.ne.s32.totalorder %s185, %s186
      %p198 = scmp.eq.s32.totalorder %s29, 1
      %p199 = por %p197, %p198
      %p201 = scmp.ne.s32.totalorder %s186, %s200
      %p202 = scmp.eq.s32.totalorder %s29, 0
      %p203 = por %p201, %p202
      %s205 = sadd.s32 %s204, 1
      %p208 = scmp.eq.s32.totalorder %s23, 1
      %p209 = scmp.ne.s32.totalorder %s204, %s206
      %p210 = scmp.eq.s32.totalorder %s23, 0
      %p211 = por %p209, %p210
      %p212 = scmp.ne.s32.totalorder %s204, %s206
      %p213 = scmp.eq.s32.totalorder %s28, 1
      %p214 = por %p212, %p213
      %p215 = scmp.ne.s32.totalorder %s206, %s207
      %p216 = scmp.eq.s32.totalorder %s28, 0
      %p217 = por %p215, %p216
      %p218 = scmp.ne.s32.totalorder %s206, %s207
      %p219 = scmp.eq.s32.totalorder %s29, 1
      %p220 = por %p218, %p219
      %p222 = scmp.ne.s32.totalorder %s207, %s221
      %p223 = scmp.eq.s32.totalorder %s29, 0
      %p224 = por %p222, %p223
      %s226 = sadd.s32 %s225, 1
      %p229 = scmp.eq.s32.totalorder %s23, 1
      %p230 = scmp.ne.s32.totalorder %s225, %s227
      %p231 = scmp.eq.s32.totalorder %s23, 0
      %p232 = por %p230, %p231
      %p233 = scmp.ne.s32.totalorder %s225, %s227
      %p234 = scmp.eq.s32.totalorder %s28, 1
      %p235 = por %p233, %p234
      %p236 = scmp.ne.s32.totalorder %s227, %s228
      %p237 = scmp.eq.s32.totalorder %s28, 0
      %p238 = por %p236, %p237
      %p239 = scmp.ne.s32.totalorder %s227, %s228
      %p240 = scmp.eq.s32.totalorder %s29, 1
      %p241 = por %p239, %p240
      %p243 = scmp.ne.s32.totalorder %s228, %s242
      %p244 = scmp.eq.s32.totalorder %s29, 0
      %p245 = por %p243, %p244
      %s247 = sadd.s32 %s246, 1
      %p250 = scmp.eq.s32.totalorder %s23, 1
      %p251 = scmp.ne.s32.totalorder %s246, %s248
      %p252 = scmp.eq.s32.totalorder %s23, 0
      %p253 = por %p251, %p252
      %p254 = scmp.ne.s32.totalorder %s246, %s248
      %p255 = scmp.eq.s32.totalorder %s28, 1
      %p256 = por %p254, %p255
      %p257 = scmp.ne.s32.totalorder %s248, %s249
      %p258 = scmp.eq.s32.totalorder %s28, 0
      %p259 = por %p257, %p258
      %p260 = scmp.ne.s32.totalorder %s248, %s249
      %p261 = scmp.eq.s32.totalorder %s29, 1
      %p262 = por %p260, %p261
      %p264 = scmp.ne.s32.totalorder %s249, %s263
      %p265 = scmp.eq.s32.totalorder %s29, 0
      %p266 = por %p264, %p265
      %s268 = sadd.s32 %s267, 1
      %p271 = scmp.eq.s32.totalorder %s23, 1
      %p272 = scmp.ne.s32.totalorder %s267, %s269
      %p273 = scmp.eq.s32.totalorder %s23, 0
      %p274 = por %p272, %p273
      %p275 = scmp.ne.s32.totalorder %s267, %s269
      %p276 = scmp.eq.s32.totalorder %s28, 1
      %p277 = por %p275, %p276
      %p278 = scmp.ne.s32.totalorder %s269, %s270
      %p279 = scmp.eq.s32.totalorder %s28, 0
      %p280 = por %p278, %p279
      %p281 = scmp.ne.s32.totalorder %s269, %s270
      %p282 = scmp.eq.s32.totalorder %s29, 1
      %p283 = por %p281, %p282
      %p285 = scmp.ne.s32.totalorder %s270, %s284
      %p286 = scmp.eq.s32.totalorder %s29, 0
      %p287 = por %p285, %p286
      %s289 = sadd.s32 %s288, 1
      %p292 = scmp.eq.s32.totalorder %s23, 1
      %p293 = scmp.ne.s32.totalorder %s288, %s290
      %p294 = scmp.eq.s32.totalorder %s23, 0
      %p295 = por %p293, %p294
      %p296 = scmp.ne.s32.totalorder %s288, %s290
      %p297 = scmp.eq.s32.totalorder %s28, 1
      %p298 = por %p296, %p297
      %p299 = scmp.ne.s32.totalorder %s290, %s291
      %p300 = scmp.eq.s32.totalorder %s28, 0
      %p301 = por %p299, %p300
      %p302 = scmp.ne.s32.totalorder %s290, %s291
      %p303 = scmp.eq.s32.totalorder %s29, 1
      %p304 = por %p302, %p303
      %p306 = scmp.ne.s32.totalorder %s291, %s305
      %p307 = scmp.eq.s32.totalorder %s29, 0
      %p308 = por %p306, %p307
      %s309 = ssub.s32 %s23, %s30
      %p310 = scmp.eq.s32.totalorder %s309, 0
      %s312 = sadd.s32 %s311, 1
      %s313 = scalar_select %p310, %s311, %s312
      %p316 = pneg %p310
      %p317 = scmp.eq.s32.totalorder %s23, 1
      %p318 = por %p316, %p317
      %p319 = scmp.ne.s32.totalorder %s311, %s314
      %p320 = scmp.eq.s32.totalorder %s23, 0
      %p321 = por %p319, %p320
      %p322 = scmp.ne.s32.totalorder %s311, %s314
      %p323 = scmp.eq.s32.totalorder %s28, 1
      %p324 = por %p322, %p323
      %p325 = scmp.ne.s32.totalorder %s314, %s315
      %p326 = scmp.eq.s32.totalorder %s28, 0
      %p327 = por %p325, %p326
      %p328 = scmp.ne.s32.totalorder %s314, %s315
      %p329 = scmp.eq.s32.totalorder %s29, 1
      %p330 = por %p328, %p329
      %p332 = scmp.ne.s32.totalorder %s315, %s331
      %p333 = scmp.eq.s32.totalorder %s29, 0
      %p334 = por %p332, %p333
      %p335 = scmp.le.s32.totalorder 1, %s23
      %p336 = scmp.lt.s32.totalorder %s23, 3
      %p337 = pnand %p335, %p336
      %p338 = pneg %p337
      // Predicated region
      $region9: #{tpu_custom_call.1} parent=5 // pred_check
        _
      $region10: #{tpu_custom_call.1} parent=5 // pred_check_branch
        %340 = sbr.rel (%p337) target = $region12
      $region11: #{tpu_custom_call.1} parent=5 // pred_region
        %s341 = ssub.s32 %s23, 1
        // Predicated region
        $region13: #{tpu_custom_call.1} parent=11 // pred_check
          %p342 = pneg %p70
        $region14: #{tpu_custom_call.1} parent=11 // pred_check_branch
          %344 = sbr.rel (%p342) target = $region16
        $region15: #{tpu_custom_call.1} parent=11 // pred_region
          _
        $region16: #{tpu_custom_call.1} parent=11 // pred_fallthru
          _
        // Predicated region
        $region17: #{tpu_custom_call.1} parent=11 // pred_check
          %p345 = pneg %p91
        $region18: #{tpu_custom_call.1} parent=11 // pred_check_branch
          %347 = sbr.rel (%p345) target = $region20
        $region19: #{tpu_custom_call.1} parent=11 // pred_region
          _
        $region20: #{tpu_custom_call.1} parent=11 // pred_fallthru
          _
        // Predicated region
        $region21: #{tpu_custom_call.1} parent=11 // pred_check
          %p348 = pneg %p112
        $region22: #{tpu_custom_call.1} parent=11 // pred_check_branch
          %350 = sbr.rel (%p348) target = $region24
        $region23: #{tpu_custom_call.1} parent=11 // pred_region
          _
        $region24: #{tpu_custom_call.1} parent=11 // pred_fallthru
          _
        // Predicated region
        $region25: #{tpu_custom_call.1} parent=11 // pred_check
          %p351 = pneg %p133
        $region26: #{tpu_custom_call.1} parent=11 // pred_check_branch
          %353 = sbr.rel (%p351) target = $region28
        $region27: #{tpu_custom_call.1} parent=11 // pred_region
          _
        $region28: #{tpu_custom_call.1} parent=11 // pred_fallthru
          _
        // Predicated region
        $region29: #{tpu_custom_call.1} parent=11 // pred_check
          %p354 = pneg %p154
        $region30: #{tpu_custom_call.1} parent=11 // pred_check_branch
          %356 = sbr.rel (%p354) target = $region32
        $region31: #{tpu_custom_call.1} parent=11 // pred_region
          _
        $region32: #{tpu_custom_call.1} parent=11 // pred_fallthru
          _
        // Predicated region
        $region33: #{tpu_custom_call.1} parent=11 // pred_check
          %p357 = pneg %p175
        $region34: #{tpu_custom_call.1} parent=11 // pred_check_branch
          %359 = sbr.rel (%p357) target = $region36
        $region35: #{tpu_custom_call.1} parent=11 // pred_region
          _
        $region36: #{tpu_custom_call.1} parent=11 // pred_fallthru
          _
        // Predicated region
        $region37: #{tpu_custom_call.1} parent=11 // pred_check
          %p360 = pneg %p196
        $region38: #{tpu_custom_call.1} parent=11 // pred_check_branch
          %362 = sbr.rel (%p360) target = $region40
        $region39: #{tpu_custom_call.1} parent=11 // pred_region
          %s364 = ssub.s32 256, 256
          %365 = vsyncadd [#allocation4], %s364
          %s366 = sshll.u32 [#allocation3], 4
          %s367 = int_to_ptr.vmem [resolvable:$true] %s366
          %372 = dma.hbm_to_vmem [thread:$0]  %s7, 256, %s367, [#allocation4], 64, 64, 4
        $region40: #{tpu_custom_call.1} parent=11 // pred_fallthru
          _
        // Predicated region
        $region41: #{tpu_custom_call.1} parent=11 // pred_check
          %p373 = pneg %p217
        $region42: #{tpu_custom_call.1} parent=11 // pred_check_branch
          %375 = sbr.rel (%p373) target = $region44
        $region43: #{tpu_custom_call.1} parent=11 // pred_region
          _
        $region44: #{tpu_custom_call.1} parent=11 // pred_fallthru
          _
        // Predicated region
        $region45: #{tpu_custom_call.1} parent=11 // pred_check
          %p376 = pneg %p238
        $region46: #{tpu_custom_call.1} parent=11 // pred_check_branch
          %378 = sbr.rel (%p376) target = $region48
        $region47: #{tpu_custom_call.1} parent=11 // pred_region
          _
        $region48: #{tpu_custom_call.1} parent=11 // pred_fallthru
          _
        // Predicated region
        $region49: #{tpu_custom_call.1} parent=11 // pred_check
          %p379 = pneg %p259
        $region50: #{tpu_custom_call.1} parent=11 // pred_check_branch
          %381 = sbr.rel (%p379) target = $region52
        $region51: #{tpu_custom_call.1} parent=11 // pred_region
          _
        $region52: #{tpu_custom_call.1} parent=11 // pred_fallthru
          _
        // Predicated region
        $region53: #{tpu_custom_call.1} parent=11 // pred_check
          %p382 = pneg %p280
        $region54: #{tpu_custom_call.1} parent=11 // pred_check_branch
          %384 = sbr.rel (%p382) target = $region56
        $region55: #{tpu_custom_call.1} parent=11 // pred_region
          _
        $region56: #{tpu_custom_call.1} parent=11 // pred_fallthru
          _
        // Predicated region
        $region57: #{tpu_custom_call.1} parent=11 // pred_check
          %p385 = pneg %p301
        $region58: #{tpu_custom_call.1} parent=11 // pred_check_branch
          %387 = sbr.rel (%p385) target = $region60
        $region59: #{tpu_custom_call.1} parent=11 // pred_region
          _
        $region60: #{tpu_custom_call.1} parent=11 // pred_fallthru
          _
      $region12: #{tpu_custom_call.1} parent=5 // pred_fallthru
        _
      %p388 = scmp.lt.s32.totalorder %s23, 2
      // Predicated region
      $region61: #{tpu_custom_call.1} parent=5 // pred_check
        %p389 = pneg %p388
      $region62: #{tpu_custom_call.1} parent=5 // pred_check_branch
        %391 = sbr.rel (%p389) target = $region64
      $region63: #{tpu_custom_call.1} parent=5 // pred_region
        // Predicated region
        $region65: #{tpu_custom_call.1} parent=63 // pred_check
          %p392 = pneg %p43
        $region66: #{tpu_custom_call.1} parent=63 // pred_check_branch
          %394 = sbr.rel (%p392) target = $region68
        $region67: #{tpu_custom_call.1} parent=63 // pred_region
          %p395 = scmp.lt.s32.totalorder %s23, 1
          %s396 = scalar_select %p395, %s23, 1
          %s397 = smul.addr %s396, 8
          %s398 = scalar_lea.vmem %s0, %s397
        $region68: #{tpu_custom_call.1} parent=63 // pred_fallthru
          _
      $region64: #{tpu_custom_call.1} parent=5 // pred_fallthru
        _
      %p399 = scmp.le.s32.totalorder 1, %s23
      %p400 = scmp.lt.s32.totalorder %s23, 3
      %p401 = pnand %p399, %p400
      %p402 = pneg %p401
      // Predicated region
      $region69: #{tpu_custom_call.1} parent=5 // pred_check
        _
      $region70: #{tpu_custom_call.1} parent=5 // pred_check_branch
        %404 = sbr.rel (%p401) target = $region72
      $region71: #{tpu_custom_call.1} parent=5 // pred_region
        %s405 = ssub.s32 %s23, 1
        // Predicated region
        $region73: #{tpu_custom_call.1} parent=71 // pred_check
          %p406 = pneg %p196
        $region74: #{tpu_custom_call.1} parent=71 // pred_check_branch
          %408 = sbr.rel (%p406) target = $region76
        $region75: #{tpu_custom_call.1} parent=71 // pred_region
          %409 = dma.done [#allocation4], 256
        $region76: #{tpu_custom_call.1} parent=71 // pred_fallthru
          _
        %p410 = scmp.lt.s32.totalorder %s28, 1
        %s411 = scalar_select %p410, %s28, 1
        %s412 = smul.addr %s411, 8
        %s413 = scalar_lea.vmem %s0, %s412
        %p414 = pneg %p49
        %p415 = pneg %p46
        %p416 = pneg %p70
        %p417 = pneg %p67
        %p418 = pneg %p91
        %p419 = pneg %p88
        %p420 = pneg %p112
        %p421 = pneg %p109
        %p422 = pneg %p133
        %p423 = pneg %p130
        %p424 = pneg %p154
        %p425 = pneg %p151
        %p426 = pneg %p175
        %p427 = pneg %p172
        %p428 = pneg %p196
        %p429 = pneg %p193
        %p430 = pneg %p217
        %p431 = pneg %p214
        %p432 = pneg %p238
        %p433 = pneg %p235
        %p434 = pneg %p259
        %p435 = pneg %p256
        %p436 = pneg %p280
        %p437 = pneg %p277
        %p438 = pneg %p301
        %p439 = pneg %p298
        %p440 = pneg %p327
        %p441 = pneg %p324
        %s442 = sand.u32 %s314, 1
        %s443 = scalar_lea.sflag [#allocation5], %s442
        %s444 = sand.u32 %s314, 1
        %s445 = smul.addr %s444, 8
        %s446 = scalar_lea.vmem [#allocation6], %s445
        %p447 = scmp.lt.s32.totalorder %s28, 1
        %s448 = scalar_select %p447, %s28, 1
        %s449 = smul.addr %s448, 8
        %s450 = scalar_lea.vmem %s0, %s449
        %v452 = vld [vmem:[%s450] sm:$0xff]
        %v453 = vpack.c.bf16 %v452, %v452
        %v454 = vld [vmem:[%s1] sm:$0xf]
        %v455 = vld [vmem:[%s1 + $0x4] sm:$0xf]
        %v456 = vld [vmem:[%s1 + $0x8] sm:$0xf]
        %v457 = vld [vmem:[%s1 + $0xc] sm:$0xf]
        %v458 = vld [vmem:[%s2] sm:$0x1]
        %v460 = vlaneseq
        %v461 = vshrl.u32 %v460, 7
        %v462 = vsub.s32 0, %v461
        %v463 = vrot.slane %v458, %v462
        %v469 = vunpack.c.l.b16 %v454
        %v470 = vunpack.c.l.b16 %v455
        %v471 = vunpack.c.l.b16 %v456
        %v472 = vunpack.c.l.b16 %v457
        %v473 = vpack.c.b16 %v470, %v469
        %v474 = vpack.c.b16 %v472, %v471
        %vm477 = vcmask 261120
        %v479 = vsel %vm477, %v453, 0
        %481 = vmatprep.subr.bf16.mxu0 0
        %482 = vmatpush1.bf16.msra.mxu0 %v473
        %483 = vmatprep.subr.bf16.mxu0 0
        %484 = vmatpush1.bf16.msra.mxu0 %v474
        %485 = vmatprep.subr.bf16.mxu0 0
        %486 = vmatpush1.bf16.msra.mxu0 0
        %487 = vmatprep.subr.bf16.mxu0 0
        %488 = vmatpush1.bf16.msra.mxu0 0
        %489 = vmatprep.subr.bf16.mxu0 0
        %490 = vmatpush1.bf16.msra.mxu0 0
        %491 = vmatprep.subr.bf16.mxu0 0
        %492 = vmatpush1.bf16.msra.mxu0 0
        %493 = vmatprep.subr.bf16.mxu0 0
        %494 = vmatpush1.bf16.msra.mxu0 0
        %495 = vmatprep.subr.bf16.mxu0 0
        %496 = vmatpush1.bf16.msra.mxu0 0
        %497 = vmatprep.subr.bf16.mxu0 0
        %498 = vmatpush1.bf16.msra.mxu0 0
        %499 = vmatprep.subr.bf16.mxu0 0
        %500 = vmatpush1.bf16.msra.mxu0 0
        %501 = vmatprep.subr.bf16.mxu0 0
        %502 = vmatpush1.bf16.msra.mxu0 0
        %503 = vmatprep.subr.bf16.mxu0 0
        %504 = vmatpush1.bf16.msra.mxu0 0
        %505 = vmatprep.subr.bf16.mxu0 0
        %506 = vmatpush1.bf16.msra.mxu0 0
        %507 = vmatprep.subr.bf16.mxu0 0
        %508 = vmatpush1.bf16.msra.mxu0 0
        %509 = vmatprep.subr.bf16.mxu0 0
        %510 = vmatpush1.bf16.msra.mxu0 0
        %511 = vmatprep.subr.bf16.mxu0 0
        %512 = vmatpush1.bf16.msra.mxu0 0
        %513 = vmatprep.mubr.bf16.mxu0 0
        %514 = vmatmul.mubr.bf16.gmra.mrb[0].mxu0 %v479
        %v515 = vpop.f32.mrb[0].mxu0
        %v516 = vadd.f32 %v463, %v515
        %v517 = vpop.f32.mrb[0].mxu0
        %v518 = vpop.f32.mrb[0].mxu0
        %v519 = vpop.f32.mrb[0].mxu0
        %520 = vdwg.mxu0
        %v521 = vpack.c.bf16 %v516, %v516
        %523 = vrot.lane.b32.xlu0 %v521, 96
        %v524 = vpop.permute.xlu0 %523
        %vm525 = vcmask 64512
        %v527 = vsel %vm525, %v521, 0
        %v530 = vsel %vm525, %v524, 0
        %532 = vmatprep.subr.bf16.mxu0 0
        %533 = vmatpush1.bf16.xpose.msra.mxu0 %v530
        %534 = vmatprep.subr.bf16.mxu0 0
        %535 = vmatpush1.bf16.xpose.msra.mxu0 0
        %536 = vmatprep.subr.bf16.mxu0 0
        %537 = vmatpush1.bf16.xpose.msra.mxu0 0
        %538 = vmatprep.subr.bf16.mxu0 0
        %539 = vmatpush1.bf16.xpose.msra.mxu0 0
        %540 = vmatprep.subr.bf16.mxu0 0
        %541 = vmatpush1.bf16.xpose.msra.mxu0 0
        %542 = vmatprep.subr.bf16.mxu0 0
        %543 = vmatpush1.bf16.xpose.msra.mxu0 0
        %544 = vmatprep.subr.bf16.mxu0 0
        %545 = vmatpush1.bf16.xpose.msra.mxu0 0
        %546 = vmatprep.subr.bf16.mxu0 0
        %547 = vmatpush1.bf16.xpose.msra.mxu0 0
        %548 = vmatprep.subr.bf16.mxu0 0
        %549 = vmatpush1.bf16.xpose.msra.mxu0 0
        %550 = vmatprep.subr.bf16.mxu0 0
        %551 = vmatpush1.bf16.xpose.msra.mxu0 0
        %552 = vmatprep.subr.bf16.mxu0 0
        %553 = vmatpush1.bf16.xpose.msra.mxu0 0
        %554 = vmatprep.subr.bf16.mxu0 0
        %555 = vmatpush1.bf16.xpose.msra.mxu0 0
        %556 = vmatprep.subr.bf16.mxu0 0
        %557 = vmatpush1.bf16.xpose.msra.mxu0 0
        %558 = vmatprep.subr.bf16.mxu0 0
        %559 = vmatpush1.bf16.xpose.msra.mxu0 0
        %560 = vmatprep.subr.bf16.mxu0 0
        %561 = vmatpush1.bf16.xpose.msra.mxu0 0
        %562 = vmatprep.subr.bf16.mxu0 0
        %563 = vmatpush1.bf16.xpose.msra.mxu0 0
        %564 = vmatprep.mubr.bf16.mxu0 0
        %565 = vmatmul.mubr.bf16.gmra.mrb[0].mxu0 %v527
        %v566 = vpop.f32.mrb[0].mxu0
        %v567 = vadd.f32 0.0, %v566
        %v568 = vpop.f32.mrb[0].mxu0
        %v569 = vpop.f32.mrb[0].mxu0
        %v570 = vpop.f32.mrb[0].mxu0
        %571 = vdwg.mxu0
        %v572 = vsel %vm525, %v567, -inf
        %573 = vmax.xlane.f32.xlu0 %v572
        %v574 = vpop.xlane.xlu0 %573
        %v575 = vsub.f32 %v567, %v574
        %v576 = vmul.f32 %v575, 1.442695
        %v577 = vpow.pop %v576
        %v578 = vsel %vm525, %v577, 0.0
        %579 = vadd.xlane.f32.xlu0 %v578
        %v580 = vpop.xlane.xlu0 %579
        %v581 = vpack.c.bf16 %v577, %v577
        %582 = vrot.lane.b32.xlu0 %v521, 64
        %v583 = vpop.permute.xlu0 %582
        %v585 = vsel %vm525, %v581, 0
        %vm587 = vcmask 1043456
        %v589 = vsel %vm587, %v583, 0
        %591 = vmatprep.subr.bf16.mxu0 0
        %592 = vmatpush1.bf16.msra.mxu0 %v589
        %593 = vmatprep.subr.bf16.mxu0 0
        %594 = vmatpush1.bf16.msra.mxu0 0
        %595 = vmatprep.subr.bf16.mxu0 0
        %596 = vmatpush1.bf16.msra.mxu0 0
        %597 = vmatprep.subr.bf16.mxu0 0
        %598 = vmatpush1.bf16.msra.mxu0 0
        %599 = vmatprep.subr.bf16.mxu0 0
        %600 = vmatpush1.bf16.msra.mxu0 0
        %601 = vmatprep.subr.bf16.mxu0 0
        %602 = vmatpush1.bf16.msra.mxu0 0
        %603 = vmatprep.subr.bf16.mxu0 0
        %604 = vmatpush1.bf16.msra.mxu0 0
        %605 = vmatprep.subr.bf16.mxu0 0
        %606 = vmatpush1.bf16.msra.mxu0 0
        %607 = vmatprep.subr.bf16.mxu0 0
        %608 = vmatpush1.bf16.msra.mxu0 0
        %609 = vmatprep.subr.bf16.mxu0 0
        %610 = vmatpush1.bf16.msra.mxu0 0
        %611 = vmatprep.subr.bf16.mxu0 0
        %612 = vmatpush1.bf16.msra.mxu0 0
        %613 = vmatprep.subr.bf16.mxu0 0
        %614 = vmatpush1.bf16.msra.mxu0 0
        %615 = vmatprep.subr.bf16.mxu0 0
        %616 = vmatpush1.bf16.msra.mxu0 0
        %617 = vmatprep.subr.bf16.mxu0 0
        %618 = vmatpush1.bf16.msra.mxu0 0
        %619 = vmatprep.subr.bf16.mxu0 0
        %620 = vmatpush1.bf16.msra.mxu0 0
        %621 = vmatprep.subr.bf16.mxu0 0
        %622 = vmatpush1.bf16.msra.mxu0 0
        %623 = vmatprep.mubr.bf16.mxu0 0
        %624 = vmatmul.mubr.bf16.gmra.mrb[0].mxu0 %v585
        %v625 = vpop.f32.mrb[0].mxu0
        %v626 = vadd.f32 0.0, %v625
        %v627 = vpop.f32.mrb[0].mxu0
        %v628 = vpop.f32.mrb[0].mxu0
        %v629 = vpop.f32.mrb[0].mxu0
        %630 = vdwg.mxu0
        %v631 = vrcp.pop %v580
        %v632 = vmul.f32 %v626, %v631
        %v633 = vpack.c.bf16 %v632, %v632
        %vm634 = vcmask 60416
        %635 = vst.msk [vmem:[#allocation2] sm:$0xf] %vm634, %v633
        %636 = vrot.lane.b32.xlu0 %v521, 120
        %v637 = vpop.permute.xlu0 %636
        %638 = vrot.lane.b32.xlu0 %v521, 88
        %v639 = vpop.permute.xlu0 %638
        %v641 = vsel %vm525, %v637, 0
        %v644 = vsel %vm525, %v639, 0
        %646 = vmatprep.subr.bf16.mxu0 0
        %647 = vmatpush1.bf16.xpose.msra.mxu0 %v644
        %648 = vmatprep.subr.bf16.mxu0 0
        %649 = vmatpush1.bf16.xpose.msra.mxu0 0
        %650 = vmatprep.subr.bf16.mxu0 0
        %651 = vmatpush1.bf16.xpose.msra.mxu0 0
        %652 = vmatprep.subr.bf16.mxu0 0
        %653 = vmatpush1.bf16.xpose.msra.mxu0 0
        %654 = vmatprep.subr.bf16.mxu0 0
        %655 = vmatpush1.bf16.xpose.msra.mxu0 0
        %656 = vmatprep.subr.bf16.mxu0 0
        %657 = vmatpush1.bf16.xpose.msra.mxu0 0
        %658 = vmatprep.subr.bf16.mxu0 0
        %659 = vmatpush1.bf16.xpose.msra.mxu0 0
        %660 = vmatprep.subr.bf16.mxu0 0
        %661 = vmatpush1.bf16.xpose.msra.mxu0 0
        %662 = vmatprep.subr.bf16.mxu0 0
        %663 = vmatpush1.bf16.xpose.msra.mxu0 0
        %664 = vmatprep.subr.bf16.mxu0 0
        %665 = vmatpush1.bf16.xpose.msra.mxu0 0
        %666 = vmatprep.subr.bf16.mxu0 0
        %667 = vmatpush1.bf16.xpose.msra.mxu0 0
        %668 = vmatprep.subr.bf16.mxu0 0
        %669 = vmatpush1.bf16.xpose.msra.mxu0 0
        %670 = vmatprep.subr.bf16.mxu0 0
        %671 = vmatpush1.bf16.xpose.msra.mxu0 0
        %672 = vmatprep.subr.bf16.mxu0 0
        %673 = vmatpush1.bf16.xpose.msra.mxu0 0
        %674 = vmatprep.subr.bf16.mxu0 0
        %675 = vmatpush1.bf16.xpose.msra.mxu0 0
        %676 = vmatprep.subr.bf16.mxu0 0
        %677 = vmatpush1.bf16.xpose.msra.mxu0 0
        %678 = vmatprep.mubr.bf16.mxu0 0
        %679 = vmatmul.mubr.bf16.gmra.mrb[0].mxu0 %v641
        %v680 = vpop.f32.mrb[0].mxu0
        %v681 = vadd.f32 0.0, %v680
        %v682 = vpop.f32.mrb[0].mxu0
        %v683 = vpop.f32.mrb[0].mxu0
        %v684 = vpop.f32.mrb[0].mxu0
        %685 = vdwg.mxu0
        %v686 = vsel %vm525, %v681, -inf
        %687 = vmax.xlane.f32.xlu0 %v686
        %v688 = vpop.xlane.xlu0 %687
        %v689 = vsub.f32 %v681, %v688
        %v690 = vmul.f32 %v689, 1.442695
        %v691 = vpow.pop %v690
        %v692 = vsel %vm525, %v691, 0.0
        %693 = vadd.xlane.f32.xlu0 %v692
        %v694 = vpop.xlane.xlu0 %693
        %v695 = vpack.c.bf16 %v691, %v691
        %696 = vrot.lane.b32.xlu0 %v521, 56
        %v697 = vpop.permute.xlu0 %696
        %v699 = vsel %vm525, %v695, 0
        %v702 = vsel %vm587, %v697, 0
        %704 = vmatprep.subr.bf16.mxu0 0
        %705 = vmatpush1.bf16.msra.mxu0 %v702
        %706 = vmatprep.subr.bf16.mxu0 0
        %707 = vmatpush1.bf16.msra.mxu0 0
        %708 = vmatprep.subr.bf16.mxu0 0
        %709 = vmatpush1.bf16.msra.mxu0 0
        %710 = vmatprep.subr.bf16.mxu0 0
        %711 = vmatpush1.bf16.msra.mxu0 0
        %712 = vmatprep.subr.bf16.mxu0 0
        %713 = vmatpush1.bf16.msra.mxu0 0
        %714 = vmatprep.subr.bf16.mxu0 0
        %715 = vmatpush1.bf16.msra.mxu0 0
        %716 = vmatprep.subr.bf16.mxu0 0
        %717 = vmatpush1.bf16.msra.mxu0 0
        %718 = vmatprep.subr.bf16.mxu0 0
        %719 = vmatpush1.bf16.msra.mxu0 0
        %720 = vmatprep.subr.bf16.mxu0 0
        %721 = vmatpush1.bf16.msra.mxu0 0
        %722 = vmatprep.subr.bf16.mxu0 0
        %723 = vmatpush1.bf16.msra.mxu0 0
        %724 = vmatprep.subr.bf16.mxu0 0
        %725 = vmatpush1.bf16.msra.mxu0 0
        %726 = vmatprep.subr.bf16.mxu0 0
        %727 = vmatpush1.bf16.msra.mxu0 0
        %728 = vmatprep.subr.bf16.mxu0 0
        %729 = vmatpush1.bf16.msra.mxu0 0
        %730 = vmatprep.subr.bf16.mxu0 0
        %731 = vmatpush1.bf16.msra.mxu0 0
        %732 = vmatprep.subr.bf16.mxu0 0
        %733 = vmatpush1.bf16.msra.mxu0 0
        %734 = vmatprep.subr.bf16.mxu0 0
        %735 = vmatpush1.bf16.msra.mxu0 0
        %736 = vmatprep.mubr.bf16.mxu0 0
        %737 = vmatmul.mubr.bf16.gmra.mrb[0].mxu0 %v699
        %v738 = vpop.f32.mrb[0].mxu0
        %v739 = vadd.f32 0.0, %v738
        %v740 = vpop.f32.mrb[0].mxu0
        %v741 = vpop.f32.mrb[0].mxu0
        %v742 = vpop.f32.mrb[0].mxu0
        %743 = vdwg.mxu0
        %v744 = vrcp.pop %v694
        %v745 = vmul.f32 %v739, %v744
        %v746 = vpack.c.bf16 %v745, %v745
        %v748 = vunpack.c.l.b16 %v746
        %v749 = vpack.c.b16 %v748, %v748
        %750 = vrot.lane.b32.xlu0 %v749, 8
        %v751 = vpop.permute.xlu0 %750
        %vm753 = vcmask 126016
        %754 = vst.msk [vmem:[#allocation2] sm:$0xf] %vm753, %v751
        %755 = vrot.lane.b32.xlu0 %v521, 112
        %v756 = vpop.permute.xlu0 %755
        %757 = vrot.lane.b32.xlu0 %v521, 80
        %v758 = vpop.permute.xlu0 %757
        %v760 = vsel %vm525, %v756, 0
        %v763 = vsel %vm525, %v758, 0
        %765 = vmatprep.subr.bf16.mxu0 0
        %766 = vmatpush1.bf16.xpose.msra.mxu0 %v763
        %767 = vmatprep.subr.bf16.mxu0 0
        %768 = vmatpush1.bf16.xpose.msra.mxu0 0
        %769 = vmatprep.subr.bf16.mxu0 0
        %770 = vmatpush1.bf16.xpose.msra.mxu0 0
        %771 = vmatprep.subr.bf16.mxu0 0
        %772 = vmatpush1.bf16.xpose.msra.mxu0 0
        %773 = vmatprep.subr.bf16.mxu0 0
        %774 = vmatpush1.bf16.xpose.msra.mxu0 0
        %775 = vmatprep.subr.bf16.mxu0 0
        %776 = vmatpush1.bf16.xpose.msra.mxu0 0
        %777 = vmatprep.subr.bf16.mxu0 0
        %778 = vmatpush1.bf16.xpose.msra.mxu0 0
        %779 = vmatprep.subr.bf16.mxu0 0
        %780 = vmatpush1.bf16.xpose.msra.mxu0 0
        %781 = vmatprep.subr.bf16.mxu0 0
        %782 = vmatpush1.bf16.xpose.msra.mxu0 0
        %783 = vmatprep.subr.bf16.mxu0 0
        %784 = vmatpush1.bf16.xpose.msra.mxu0 0
        %785 = vmatprep.subr.bf16.mxu0 0
        %786 = vmatpush1.bf16.xpose.msra.mxu0 0
        %787 = vmatprep.subr.bf16.mxu0 0
        %788 = vmatpush1.bf16.xpose.msra.mxu0 0
        %789 = vmatprep.subr.bf16.mxu0 0
        %790 = vmatpush1.bf16.xpose.msra.mxu0 0
        %791 = vmatprep.subr.bf16.mxu0 0
        %792 = vmatpush1.bf16.xpose.msra.mxu0 0
        %793 = vmatprep.subr.bf16.mxu0 0
        %794 = vmatpush1.bf16.xpose.msra.mxu0 0
        %795 = vmatprep.subr.bf16.mxu0 0
        %796 = vmatpush1.bf16.xpose.msra.mxu0 0
        %797 = vmatprep.mubr.bf16.mxu0 0
        %798 = vmatmul.mubr.bf16.gmra.mrb[0].mxu0 %v760
        %v799 = vpop.f32.mrb[0].mxu0
        %v800 = vadd.f32 0.0, %v799
        %v801 = vpop.f32.mrb[0].mxu0
        %v802 = vpop.f32.mrb[0].mxu0
        %v803 = vpop.f32.mrb[0].mxu0
        %804 = vdwg.mxu0
        %v805 = vsel %vm525, %v800, -inf
        %806 = vmax.xlane.f32.xlu0 %v805
        %v807 = vpop.xlane.xlu0 %806
        %v808 = vsub.f32 %v800, %v807
        %v809 = vmul.f32 %v808, 1.442695
        %v810 = vpow.pop %v809
        %v811 = vsel %vm525, %v810, 0.0
        %812 = vadd.xlane.f32.xlu0 %v811
        %v813 = vpop.xlane.xlu0 %812
        %v814 = vpack.c.bf16 %v810, %v810
        %815 = vrot.lane.b32.xlu0 %v521, 48
        %v816 = vpop.permute.xlu0 %815
        %v818 = vsel %vm525, %v814, 0
        %v821 = vsel %vm587, %v816, 0
        %823 = vmatprep.subr.bf16.mxu0 0
        %824 = vmatpush1.bf16.msra.mxu0 %v821
        %825 = vmatprep.subr.bf16.mxu0 0
        %826 = vmatpush1.bf16.msra.mxu0 0
        %827 = vmatprep.subr.bf16.mxu0 0
        %828 = vmatpush1.bf16.msra.mxu0 0
        %829 = vmatprep.subr.bf16.mxu0 0
        %830 = vmatpush1.bf16.msra.mxu0 0
        %831 = vmatprep.subr.bf16.mxu0 0
        %832 = vmatpush1.bf16.msra.mxu0 0
        %833 = vmatprep.subr.bf16.mxu0 0
        %834 = vmatpush1.bf16.msra.mxu0 0
        %835 = vmatprep.subr.bf16.mxu0 0
        %836 = vmatpush1.bf16.msra.mxu0 0
        %837 = vmatprep.subr.bf16.mxu0 0
        %838 = vmatpush1.bf16.msra.mxu0 0
        %839 = vmatprep.subr.bf16.mxu0 0
        %840 = vmatpush1.bf16.msra.mxu0 0
        %841 = vmatprep.subr.bf16.mxu0 0
        %842 = vmatpush1.bf16.msra.mxu0 0
        %843 = vmatprep.subr.bf16.mxu0 0
        %844 = vmatpush1.bf16.msra.mxu0 0
        %845 = vmatprep.subr.bf16.mxu0 0
        %846 = vmatpush1.bf16.msra.mxu0 0
        %847 = vmatprep.subr.bf16.mxu0 0
        %848 = vmatpush1.bf16.msra.mxu0 0
        %849 = vmatprep.subr.bf16.mxu0 0
        %850 = vmatpush1.bf16.msra.mxu0 0
        %851 = vmatprep.subr.bf16.mxu0 0
        %852 = vmatpush1.bf16.msra.mxu0 0
        %853 = vmatprep.subr.bf16.mxu0 0
        %854 = vmatpush1.bf16.msra.mxu0 0
        %855 = vmatprep.mubr.bf16.mxu0 0
        %856 = vmatmul.mubr.bf16.gmra.mrb[0].mxu0 %v818
        %v857 = vpop.f32.mrb[0].mxu0
        %v858 = vadd.f32 0.0, %v857
        %v859 = vpop.f32.mrb[0].mxu0
        %v860 = vpop.f32.mrb[0].mxu0
        %v861 = vpop.f32.mrb[0].mxu0
        %862 = vdwg.mxu0
        %v863 = vrcp.pop %v813
        %v864 = vmul.f32 %v858, %v863
        %v865 = vpack.c.bf16 %v864, %v864
        %v867 = vunpack.c.l.b16 %v865
        %v868 = vpack.c.b16 %v867, %v867
        %869 = vrot.lane.b32.xlu0 %v868, 16
        %v870 = vpop.permute.xlu0 %869
        %vm872 = vcmask 191616
        %873 = vst.msk [vmem:[#allocation2] sm:$0xf] %vm872, %v870
        %874 = vrot.lane.b32.xlu0 %v521, 104
        %v875 = vpop.permute.xlu0 %874
        %876 = vrot.lane.b32.xlu0 %v521, 72
        %v877 = vpop.permute.xlu0 %876
        %v879 = vsel %vm525, %v875, 0
        %v882 = vsel %vm525, %v877, 0
        %884 = vmatprep.subr.bf16.mxu0 0
        %885 = vmatpush1.bf16.xpose.msra.mxu0 %v882
        %886 = vmatprep.subr.bf16.mxu0 0
        %887 = vmatpush1.bf16.xpose.msra.mxu0 0
        %888 = vmatprep.subr.bf16.mxu0 0
        %889 = vmatpush1.bf16.xpose.msra.mxu0 0
        %890 = vmatprep.subr.bf16.mxu0 0
        %891 = vmatpush1.bf16.xpose.msra.mxu0 0
        %892 = vmatprep.subr.bf16.mxu0 0
        %893 = vmatpush1.bf16.xpose.msra.mxu0 0
        %894 = vmatprep.subr.bf16.mxu0 0
        %895 = vmatpush1.bf16.xpose.msra.mxu0 0
        %896 = vmatprep.subr.bf16.mxu0 0
        %897 = vmatpush1.bf16.xpose.msra.mxu0 0
        %898 = vmatprep.subr.bf16.mxu0 0
        %899 = vmatpush1.bf16.xpose.msra.mxu0 0
        %900 = vmatprep.subr.bf16.mxu0 0
        %901 = vmatpush1.bf16.xpose.msra.mxu0 0
        %902 = vmatprep.subr.bf16.mxu0 0
        %903 = vmatpush1.bf16.xpose.msra.mxu0 0
        %904 = vmatprep.subr.bf16.mxu0 0
        %905 = vmatpush1.bf16.xpose.msra.mxu0 0
        %906 = vmatprep.subr.bf16.mxu0 0
        %907 = vmatpush1.bf16.xpose.msra.mxu0 0
        %908 = vmatprep.subr.bf16.mxu0 0
        %909 = vmatpush1.bf16.xpose.msra.mxu0 0
        %910 = vmatprep.subr.bf16.mxu0 0
        %911 = vmatpush1.bf16.xpose.msra.mxu0 0
        %912 = vmatprep.subr.bf16.mxu0 0
        %913 = vmatpush1.bf16.xpose.msra.mxu0 0
        %914 = vmatprep.subr.bf16.mxu0 0
        %915 = vmatpush1.bf16.xpose.msra.mxu0 0
        %916 = vmatprep.mubr.bf16.mxu0 0
        %917 = vmatmul.mubr.bf16.gmra.mrb[0].mxu0 %v879
        %v918 = vpop.f32.mrb[0].mxu0
        %v919 = vadd.f32 0.0, %v918
        %v920 = vpop.f32.mrb[0].mxu0
        %v921 = vpop.f32.mrb[0].mxu0
        %v922 = vpop.f32.mrb[0].mxu0
        %923 = vdwg.mxu0
        %v924 = vsel %vm525, %v919, -inf
        %925 = vmax.xlane.f32.xlu0 %v924
        %v926 = vpop.xlane.xlu0 %925
        %v927 = vsub.f32 %v919, %v926
        %v928 = vmul.f32 %v927, 1.442695
        %v929 = vpow.pop %v928
        %v930 = vsel %vm525, %v929, 0.0
        %931 = vadd.xlane.f32.xlu0 %v930
        %v932 = vpop.xlane.xlu0 %931
        %v933 = vpack.c.bf16 %v929, %v929
        %934 = vrot.lane.b32.xlu0 %v521, 40
        %v935 = vpop.permute.xlu0 %934
        %v937 = vsel %vm525, %v933, 0
        %v940 = vsel %vm587, %v935, 0
        %942 = vmatprep.subr.bf16.mxu0 0
        %943 = vmatpush1.bf16.msra.mxu0 %v940
        %944 = vmatprep.subr.bf16.mxu0 0
        %945 = vmatpush1.bf16.msra.mxu0 0
        %946 = vmatprep.subr.bf16.mxu0 0
        %947 = vmatpush1.bf16.msra.mxu0 0
        %948 = vmatprep.subr.bf16.mxu0 0
        %949 = vmatpush1.bf16.msra.mxu0 0
        %950 = vmatprep.subr.bf16.mxu0 0
        %951 = vmatpush1.bf16.msra.mxu0 0
        %952 = vmatprep.subr.bf16.mxu0 0
        %953 = vmatpush1.bf16.msra.mxu0 0
        %954 = vmatprep.subr.bf16.mxu0 0
        %955 = vmatpush1.bf16.msra.mxu0 0
        %956 = vmatprep.subr.bf16.mxu0 0
        %957 = vmatpush1.bf16.msra.mxu0 0
        %958 = vmatprep.subr.bf16.mxu0 0
        %959 = vmatpush1.bf16.msra.mxu0 0
        %960 = vmatprep.subr.bf16.mxu0 0
        %961 = vmatpush1.bf16.msra.mxu0 0
        %962 = vmatprep.subr.bf16.mxu0 0
        %963 = vmatpush1.bf16.msra.mxu0 0
        %964 = vmatprep.subr.bf16.mxu0 0
        %965 = vmatpush1.bf16.msra.mxu0 0
        %966 = vmatprep.subr.bf16.mxu0 0
        %967 = vmatpush1.bf16.msra.mxu0 0
        %968 = vmatprep.subr.bf16.mxu0 0
        %969 = vmatpush1.bf16.msra.mxu0 0
        %970 = vmatprep.subr.bf16.mxu0 0
        %971 = vmatpush1.bf16.msra.mxu0 0
        %972 = vmatprep.subr.bf16.mxu0 0
        %973 = vmatpush1.bf16.msra.mxu0 0
        %974 = vmatprep.mubr.bf16.mxu0 0
        %975 = vmatmul.mubr.bf16.gmra.mrb[0].mxu0 %v937
        %v976 = vpop.f32.mrb[0].mxu0
        %v977 = vadd.f32 0.0, %v976
        %v978 = vpop.f32.mrb[0].mxu0
        %v979 = vpop.f32.mrb[0].mxu0
        %v980 = vpop.f32.mrb[0].mxu0
        %981 = vdwg.mxu0
        %v982 = vrcp.pop %v932
        %v983 = vmul.f32 %v977, %v982
        %v984 = vpack.c.bf16 %v983, %v983
        %v986 = vunpack.c.l.b16 %v984
        %v987 = vpack.c.b16 %v986, %v986
        %988 = vrot.lane.b32.xlu0 %v987, 24
        %v989 = vpop.permute.xlu0 %988
        %vm991 = vcmask 257216
        %992 = vst.msk [vmem:[#allocation2] sm:$0xf] %vm991, %v989
        %v993 = vld [vmem:[#allocation2] sm:$0xf]
        %v994 = vld [vmem:[%s3] sm:$0xf]
        %v995 = vld [vmem:[%s3 + $0x4] sm:$0xf]
        %v996 = vld [vmem:[%s3 + $0x8] sm:$0xf]
        %v997 = vld [vmem:[%s3 + $0xc] sm:$0xf]
        %v998 = vld [vmem:[%s4] sm:$0x1]
        %v1000 = vlaneseq
        %v1001 = vshrl.u32 %v1000, 7
        %v1002 = vsub.s32 0, %v1001
        %v1003 = vrot.slane %v998, %v1002
        %v1009 = vunpack.c.l.b16 %v994
        %v1010 = vunpack.c.l.b16 %v995
        %v1011 = vunpack.c.l.b16 %v996
        %v1012 = vunpack.c.l.b16 %v997
        %v1013 = vpack.c.b16 %v1010, %v1009
        %v1014 = vpack.c.b16 %v1012, %v1011
        %v1018 = vsel %vm477, %v993, 0
        %1020 = vmatprep.subr.bf16.mxu0 0
        %1021 = vmatpush1.bf16.msra.mxu0 %v1013
        %1022 = vmatprep.subr.bf16.mxu0 0
        %1023 = vmatpush1.bf16.msra.mxu0 %v1014
        %1024 = vmatprep.subr.bf16.mxu0 0
        %1025 = vmatpush1.bf16.msra.mxu0 0
        %1026 = vmatprep.subr.bf16.mxu0 0
        %1027 = vmatpush1.bf16.msra.mxu0 0
        %1028 = vmatprep.subr.bf16.mxu0 0
        %1029 = vmatpush1.bf16.msra.mxu0 0
        %1030 = vmatprep.subr.bf16.mxu0 0
        %1031 = vmatpush1.bf16.msra.mxu0 0
        %1032 = vmatprep.subr.bf16.mxu0 0
        %1033 = vmatpush1.bf16.msra.mxu0 0
        %1034 = vmatprep.subr.bf16.mxu0 0
        %1035 = vmatpush1.bf16.msra.mxu0 0
        %1036 = vmatprep.subr.bf16.mxu0 0
        %1037 = vmatpush1.bf16.msra.mxu0 0
        %1038 = vmatprep.subr.bf16.mxu0 0
        %1039 = vmatpush1.bf16.msra.mxu0 0
        %1040 = vmatprep.subr.bf16.mxu0 0
        %1041 = vmatpush1.bf16.msra.mxu0 0
        %1042 = vmatprep.subr.bf16.mxu0 0
        %1043 = vmatpush1.bf16.msra.mxu0 0
        %1044 = vmatprep.subr.bf16.mxu0 0
        %1045 = vmatpush1.bf16.msra.mxu0 0
        %1046 = vmatprep.subr.bf16.mxu0 0
        %1047 = vmatpush1.bf16.msra.mxu0 0
        %1048 = vmatprep.subr.bf16.mxu0 0
        %1049 = vmatpush1.bf16.msra.mxu0 0
        %1050 = vmatprep.subr.bf16.mxu0 0
        %1051 = vmatpush1.bf16.msra.mxu0 0
        %1052 = vmatprep.mubr.bf16.mxu0 0
        %1053 = vmatmul.mubr.bf16.gmra.mrb[0].mxu0 %v1018
        %v1054 = vpop.f32.mrb[0].mxu0
        %v1055 = vadd.f32 %v1003, %v1054
        %v1056 = vpop.f32.mrb[0].mxu0
        %v1057 = vpop.f32.mrb[0].mxu0
        %v1058 = vpop.f32.mrb[0].mxu0
        %1059 = vdwg.mxu0
        %v1060 = vadd.f32 %v452, %v1055
        %v1061 = vsel %vm477, %v1060, 0.0
        %1062 = vadd.xlane.f32.xlu0 %v1061
        %v1063 = vpop.xlane.xlu0 %1062
        %v1064 = vrcp.pop 32.0
        %v1065 = vmul.f32 %v1063, %v1064
        %v1066 = vsub.f32 %v1060, %v1065
        %v1067 = vmul.f32 %v1066, %v1066
        %v1068 = vsel %vm477, %v1067, 0.0
        %1069 = vadd.xlane.f32.xlu0 %v1068
        %v1070 = vpop.xlane.xlu0 %1069
        %v1071 = vmul.f32 %v1070, %v1064
        %v1072 = vadd.f32 %v1071, 1e-05
        %v1073 = vrsqrt.pop %v1072
        %v1074 = vmul.f32 %v1066, %v1073
        %v1075 = vld [vmem:[%s5] sm:$0x1]
        %v1077 = vlaneseq
        %v1078 = vshrl.u32 %v1077, 7
        %v1079 = vsub.s32 0, %v1078
        %v1080 = vrot.slane %v1075, %v1079
        %v1082 = vmul.f32 %v1074, %v1080
        %v1083 = vld [vmem:[%s6] sm:$0x1]
        %v1085 = vlaneseq
        %v1086 = vshrl.u32 %v1085, 7
        %v1087 = vsub.s32 0, %v1086
        %v1088 = vrot.slane %v1083, %v1087
        %v1090 = vadd.f32 %v1082, %v1088
        %v1091 = vpack.c.bf16 %v1090, %v1090
        %v1092 = vld [vmem:[#allocation3] sm:$0xf]
        %v1093 = vld [vmem:[#allocation3 + $0x4] sm:$0xf]
        %v1094 = vld [vmem:[#allocation3 + $0x8] sm:$0xf]
        %v1095 = vld [vmem:[#allocation3 + $0xc] sm:$0xf]
        %v1096 = vld [vmem:[%s8] sm:$0x1]
        %v1098 = vlaneseq
        %v1099 = vshrl.u32 %v1098, 7
        %v1100 = vsub.s32 0, %v1099
        %v1101 = vrot.slane %v1096, %v1100
        %v1107 = vunpack.c.l.b16 %v1092
        %v1108 = vunpack.c.l.b16 %v1093
        %v1109 = vunpack.c.l.b16 %v1094
        %v1110 = vunpack.c.l.b16 %v1095
        %v1111 = vpack.c.b16 %v1108, %v1107
        %v1112 = vpack.c.b16 %v1110, %v1109
        %v1116 = vsel %vm477, %v1091, 0
        %1118 = vmatprep.subr.bf16.mxu0 0
        %1119 = vmatpush1.bf16.msra.mxu0 %v1111
        %1120 = vmatprep.subr.bf16.mxu0 0
        %1121 = vmatpush1.bf16.msra.mxu0 %v1112
        %1122 = vmatprep.subr.bf16.mxu0 0
        %1123 = vmatpush1.bf16.msra.mxu0 0
        %1124 = vmatprep.subr.bf16.mxu0 0
        %1125 = vmatpush1.bf16.msra.mxu0 0
        %1126 = vmatprep.subr.bf16.mxu0 0
        %1127 = vmatpush1.bf16.msra.mxu0 0
        %1128 = vmatprep.subr.bf16.mxu0 0
        %1129 = vmatpush1.bf16.msra.mxu0 0
        %1130 = vmatprep.subr.bf16.mxu0 0
        %1131 = vmatpush1.bf16.msra.mxu0 0
        %1132 = vmatprep.subr.bf16.mxu0 0
        %1133 = vmatpush1.bf16.msra.mxu0 0
        %1134 = vmatprep.subr.bf16.mxu0 0
        %1135 = vmatpush1.bf16.msra.mxu0 0
        %1136 = vmatprep.subr.bf16.mxu0 0
        %1137 = vmatpush1.bf16.msra.mxu0 0
        %1138 = vmatprep.subr.bf16.mxu0 0
        %1139 = vmatpush1.bf16.msra.mxu0 0
        %1140 = vmatprep.subr.bf16.mxu0 0
        %1141 = vmatpush1.bf16.msra.mxu0 0
        %1142 = vmatprep.subr.bf16.mxu0 0
        %1143 = vmatpush1.bf16.msra.mxu0 0
        %1144 = vmatprep.subr.bf16.mxu0 0
        %1145 = vmatpush1.bf16.msra.mxu0 0
        %1146 = vmatprep.subr.bf16.mxu0 0
        %1147 = vmatpush1.bf16.msra.mxu0 0
        %1148 = vmatprep.subr.bf16.mxu0 0
        %1149 = vmatpush1.bf16.msra.mxu0 0
        %1150 = vmatprep.mubr.bf16.mxu0 0
        %1151 = vmatmul.mubr.bf16.gmra.mrb[0].mxu0 %v1116
        %v1152 = vpop.f32.mrb[0].mxu0
        %v1153 = vadd.f32 %v1101, %v1152
        %v1154 = vpop.f32.mrb[0].mxu0
        %v1155 = vpop.f32.mrb[0].mxu0
        %v1156 = vpop.f32.mrb[0].mxu0
        %1157 = vdwg.mxu0
        %v1158 = vmax.f32 %v1153, 0.0
        %v1159 = vpack.c.bf16 %v1158, %v1158
        %v1160 = vld [vmem:[%s9] sm:$0xf]
        %v1161 = vld [vmem:[%s9 + $0x4] sm:$0xf]
        %v1162 = vld [vmem:[%s9 + $0x8] sm:$0xf]
        %v1163 = vld [vmem:[%s9 + $0xc] sm:$0xf]
        %v1164 = vld [vmem:[%s9 + $0x10] sm:$0xf]
        %v1165 = vld [vmem:[%s9 + $0x14] sm:$0xf]
        %v1166 = vld [vmem:[%s9 + $0x18] sm:$0xf]
        %v1167 = vld [vmem:[%s9 + $0x1c] sm:$0xf]
        %v1168 = vld [vmem:[%s10] sm:$0x1]
        %v1170 = vlaneseq
        %v1171 = vshrl.u32 %v1170, 7
        %v1172 = vsub.s32 0, %v1171
        %v1173 = vrot.slane %v1168, %v1172
        %v1183 = vunpack.c.l.b16 %v1160
        %v1184 = vunpack.c.l.b16 %v1161
        %v1185 = vunpack.c.l.b16 %v1162
        %v1186 = vunpack.c.l.b16 %v1163
        %v1187 = vunpack.c.l.b16 %v1164
        %v1188 = vunpack.c.l.b16 %v1165
        %v1189 = vunpack.c.l.b16 %v1166
        %v1190 = vunpack.c.l.b16 %v1167
        %v1191 = vpack.c.b16 %v1184, %v1183
        %v1192 = vpack.c.b16 %v1186, %v1185
        %v1193 = vpack.c.b16 %v1188, %v1187
        %v1194 = vpack.c.b16 %v1190, %v1189
        %vm1199 = vcmask 523264
        %v1201 = vsel %vm1199, %v1159, 0
        %1203 = vmatprep.subr.bf16.mxu0 0
        %1204 = vmatpush1.bf16.msra.mxu0 %v1191
        %1205 = vmatprep.subr.bf16.mxu0 0
        %1206 = vmatpush1.bf16.msra.mxu0 %v1192
        %1207 = vmatprep.subr.bf16.mxu0 0
        %1208 = vmatpush1.bf16.msra.mxu0 %v1193
        %1209 = vmatprep.subr.bf16.mxu0 0
        %1210 = vmatpush1.bf16.msra.mxu0 %v1194
        %1211 = vmatprep.subr.bf16.mxu0 0
        %1212 = vmatpush1.bf16.msra.mxu0 0
        %1213 = vmatprep.subr.bf16.mxu0 0
        %1214 = vmatpush1.bf16.msra.mxu0 0
        %1215 = vmatprep.subr.bf16.mxu0 0
        %1216 = vmatpush1.bf16.msra.mxu0 0
        %1217 = vmatprep.subr.bf16.mxu0 0
        %1218 = vmatpush1.bf16.msra.mxu0 0
        %1219 = vmatprep.subr.bf16.mxu0 0
        %1220 = vmatpush1.bf16.msra.mxu0 0
        %1221 = vmatprep.subr.bf16.mxu0 0
        %1222 = vmatpush1.bf16.msra.mxu0 0
        %1223 = vmatprep.subr.bf16.mxu0 0
        %1224 = vmatpush1.bf16.msra.mxu0 0
        %1225 = vmatprep.subr.bf16.mxu0 0
        %1226 = vmatpush1.bf16.msra.mxu0 0
        %1227 = vmatprep.subr.bf16.mxu0 0
        %1228 = vmatpush1.bf16.msra.mxu0 0
        %1229 = vmatprep.subr.bf16.mxu0 0
        %1230 = vmatpush1.bf16.msra.mxu0 0
        %1231 = vmatprep.subr.bf16.mxu0 0
        %1232 = vmatpush1.bf16.msra.mxu0 0
        %1233 = vmatprep.subr.bf16.mxu0 0
        %1234 = vmatpush1.bf16.msra.mxu0 0
        %1235 = vmatprep.mubr.bf16.mxu0 0
        %1236 = vmatmul.mubr.bf16.gmra.mrb[0].mxu0 %v1201
        %v1237 = vpop.f32.mrb[0].mxu0
        %v1238 = vadd.f32 %v1173, %v1237
        %v1239 = vpop.f32.mrb[0].mxu0
        %v1240 = vpop.f32.mrb[0].mxu0
        %v1241 = vpop.f32.mrb[0].mxu0
        %1242 = vdwg.mxu0
        %v1243 = vadd.f32 %v1090, %v1238
        %v1244 = vsel %vm477, %v1243, 0.0
        %1245 = vadd.xlane.f32.xlu0 %v1244
        %v1246 = vpop.xlane.xlu0 %1245
        %v1247 = vmul.f32 %v1246, %v1064
        %v1248 = vsub.f32 %v1243, %v1247
        %v1249 = vmul.f32 %v1248, %v1248
        %v1250 = vsel %vm477, %v1249, 0.0
        %1251 = vadd.xlane.f32.xlu0 %v1250
        %v1252 = vpop.xlane.xlu0 %1251
        %v1253 = vmul.f32 %v1252, %v1064
        %v1254 = vadd.f32 %v1253, 1e-05
        %v1255 = vrsqrt.pop %v1254
        %v1256 = vmul.f32 %v1248, %v1255
        %v1257 = vld [vmem:[%s11] sm:$0x1]
        %v1259 = vlaneseq
        %v1260 = vshrl.u32 %v1259, 7
        %v1261 = vsub.s32 0, %v1260
        %v1262 = vrot.slane %v1257, %v1261
        %v1264 = vmul.f32 %v1256, %v1262
        %v1265 = vld [vmem:[%s12] sm:$0x1]
        %v1267 = vlaneseq
        %v1268 = vshrl.u32 %v1267, 7
        %v1269 = vsub.s32 0, %v1268
        %v1270 = vrot.slane %v1265, %v1269
        %v1272 = vadd.f32 %v1264, %v1270
        %1273 = vst.msk [vmem:[%s446] sm:$0xff] %vm477, %v1272
        %s1274 = sand.u32 %s314, 1
        %s1275 = scalar_lea.sflag [#allocation5], %s1274
        %s1276 = sand.u32 %s314, 1
        %s1277 = smul.addr %s1276, 8
        %s1278 = scalar_lea.vmem [#allocation6], %s1277
        // Predicated region
        $region77: #{tpu_custom_call.1} parent=71 // pred_check
          %p1279 = pneg %p324
        $region78: #{tpu_custom_call.1} parent=71 // pred_check_branch
          %1281 = sbr.rel (%p1279) target = $region80
        $region79: #{tpu_custom_call.1} parent=71 // pred_region
          %s1283 = ssub.s32 128, 128
          %1284 = vsyncadd %s1275, %s1283
          %s1285 = smul.addr %s28, 128
          %s1286 = scalar_lea.hbm %s13, %s1285
          %s1288 = sshll.u32 %s1278, 4
          %s1289 = int_to_ptr.vmem [resolvable:$true] %s1288
          %1291 = dma.vmem_to_hbm [thread:$0]  %s1289, 128, %s1286, %s1275
        $region80: #{tpu_custom_call.1} parent=71 // pred_fallthru
          _
      $region72: #{tpu_custom_call.1} parent=5 // pred_fallthru
        _
      %p1292 = scmp.le.s32.totalorder 2, %s23
      // Predicated region
      $region81: #{tpu_custom_call.1} parent=5 // pred_check
        %p1293 = pneg %p1292
      $region82: #{tpu_custom_call.1} parent=5 // pred_check_branch
        %1295 = sbr.rel (%p1293) target = $region84
      $region83: #{tpu_custom_call.1} parent=5 // pred_region
        %s1296 = ssub.s32 %s23, 2
        // Predicated region
        $region85: #{tpu_custom_call.1} parent=83 // pred_check
          %p1297 = pneg %p330
        $region86: #{tpu_custom_call.1} parent=83 // pred_check_branch
          %1299 = sbr.rel (%p1297) target = $region88
        $region87: #{tpu_custom_call.1} parent=83 // pred_region
          %s1300 = sand.u32 %s315, 1
          %s1301 = scalar_lea.sflag [#allocation5], %s1300
          %s1302 = sand.u32 %s315, 1
          %s1303 = smul.addr %s1302, 8
          %s1304 = scalar_lea.vmem [#allocation6], %s1303
          %1305 = dma.done %s1301, 128
        $region88: #{tpu_custom_call.1} parent=83 // pred_fallthru
          _
      $region84: #{tpu_custom_call.1} parent=5 // pred_fallthru
        _
    $region6: #{tpu_custom_call.1} parent=1 // loop_footer
      %s27 = sadd.s32 1, %s23
    $region7: #{tpu_custom_call.1} parent=1 // loop_footer_branch
      %22 = sbr.rel target = $region3
    $region8: #{tpu_custom_call.1} parent=1 // loop_exit
      _
    %1306 = vsyncpa [#allocation4], 1
    %s1307 = scalar_lea.sflag [#allocation4], 1
    %1308 = vsyncpa %s1307, 1
    %1309 = vsyncpa [#allocation5], 1
    %s1310 = scalar_lea.sflag [#allocation5], 1
    %1311 = vsyncpa %s1310, 1

</llo_original>
